<compile_context>
chip_gen: v5e
topology: v5e:2x2
jax: 0.10.0
libtpu: 0.0.40
codegen_flags: <defaults>
</compile_context>

<pallas_src>
import math

import jax
import jax.numpy as jnp
from jax import lax
from jax.experimental import pallas as pl
from jax.experimental.pallas import tpu as pltpu


def _dqn_kernel(x_ref,
                w1_ref, b1_ref,
                w2_ref, b2_ref,
                w3_ref, b3_ref,
                w4_ref, b4_ref,
                o_ref):
    """Fused MLP: 3x (Linear + ReLU) then Linear(->1), written as a (1, tm) row.

    Dropout layers from the PyTorch module are identity at inference time,
    so they are intentionally omitted.
    """
    # Layers 1-3: bf16 MXU matmuls with f32 accumulation; epilogue in f32 (VPU).
    h = jnp.dot(x_ref[...].astype(jnp.bfloat16), w1_ref[...],
                preferred_element_type=jnp.float32)
    h = jnp.maximum(h + b1_ref[...], 0.0)

    h = jnp.dot(h.astype(jnp.bfloat16), w2_ref[...],
                preferred_element_type=jnp.float32)
    h = jnp.maximum(h + b2_ref[...], 0.0)

    h = jnp.dot(h.astype(jnp.bfloat16), w3_ref[...],
                preferred_element_type=jnp.float32)
    h = jnp.maximum(h + b3_ref[...], 0.0)

    # Final layer (out_features = 1): contract w4 (1, h3) with h (tm, h3) along the
    # last dim of both -> lane-dense (1, tm) row; avoids a (tm, 1) masked store.
    q = lax.dot_general(w4_ref[...], h.astype(jnp.bfloat16),
                        dimension_numbers=(((1,), (1,)), ((), ())),
                        preferred_element_type=jnp.float32)
    o_ref[...] = (q + b4_ref[0, 0]).astype(o_ref.dtype)


def dqn_forward(x, params, *, tm=256):
    """Run the fused DQN forward pass.

    Args:
      x: [B, state_size + action_size] float32 (any B; padded internally).
      params: dict with w1..w4 stored as [in_features, out_features] float32 and
        b1..b4 as [1, out_features] float32 (see init_dqn_params).
      tm: batch tile (multiple of 128). 256 fills the MXU M dim on v6e/v7x; 128
        is also a good choice on v5e or to give v7x's two cores >=2 grid steps.
    Returns:
      q_values: [B] float32 (matches PyTorch forward's squeeze(-1)).
    """
    assert tm % 128 == 0, "tm must be a multiple of 128 for lane-dense output tiles"
    B, D = x.shape

    # MXU operands in bf16 (f32 accumulation happens in-kernel); biases stay f32.
    w1 = params["w1"].astype(jnp.bfloat16)
    w2 = params["w2"].astype(jnp.bfloat16)
    w3 = params["w3"].astype(jnp.bfloat16)
    w4 = params["w4"].reshape(1, -1).astype(jnp.bfloat16)   # (1, h3) row
    b1, b2, b3 = params["b1"], params["b2"], params["b3"]
    b4 = params["b4"].reshape(1, 1).astype(jnp.float32)      # SMEM scalar

    h1 = w1.shape[1]
    h2 = w2.shape[1]
    h3 = w3.shape[1]

    # Pad batch to a tile multiple (padded rows are sliced off below).
    Bp = pl.cdiv(B, tm) * tm
    xp = x if Bp == B else jnp.pad(x, ((0, Bp - B), (0, 0)))
    grid = (Bp // tm,)

    flops = 2 * Bp * (D * h1 + h1 * h2 + h2 * h3 + h3)
    bytes_accessed = (
        xp.size * xp.dtype.itemsize
        + sum(int(a.size) * a.dtype.itemsize
              for a in (w1, b1, w2, b2, w3, b3, w4, b4))
        + Bp * 4)

    def const_spec(shape):
        # Full-array block, same block for every grid step (resident in VMEM).
        return pl.BlockSpec(shape, lambda i: (0, 0))

    out = pl.pallas_call(
        _dqn_kernel,
        out_shape=jax.ShapeDtypeStruct((1, Bp), jnp.float32),
        grid_spec=pl.GridSpec(
            grid=grid,
            in_specs=[
                pl.BlockSpec((tm, D), lambda i: (i, 0)),     # x: tiled over batch
                const_spec((D, h1)), const_spec((1, h1)),
                const_spec((h1, h2)), const_spec((1, h2)),
                const_spec((h2, h3)), const_spec((1, h3)),
                const_spec((1, h3)),                          # w4 as a row
                pl.BlockSpec(memory_space=pltpu.MemorySpace.SMEM),  # b4 scalar
            ],
            out_specs=pl.BlockSpec((1, tm), lambda i: (0, i)),  # lane-dense row
        ),
        compiler_params=pltpu.CompilerParams(
            dimension_semantics=("parallel",),
        ),
        cost_estimate=pl.CostEstimate(
            flops=flops, transcendentals=0, bytes_accessed=bytes_accessed),
    )(xp, w1, b1, w2, b2, w3, b3, w4, b4)

    return out[0, :B]  # squeeze(-1) -> [B]


def xavier_uniform(key, fan_in, fan_out, dtype=jnp.float32):
    """PyTorch nn.init.xavier_uniform_ for a Linear weight, stored as [in, out]."""
    limit = math.sqrt(6.0 / (fan_in + fan_out))
    return jax.random.uniform(key, (fan_in, fan_out), dtype=dtype,
                              minval=-limit, maxval=limit)


def init_dqn_params(key, state_size, action_size=2,
                    hidden_layers=(512, 256, 128)):
    """Deterministic Xavier-uniform weights, zero biases (matches _init_weights)."""
    sizes = [state_size + action_size] + list(hidden_layers) + [1]
    keys = jax.random.split(key, len(sizes) - 1)
    params = {}
    for idx, (fan_in, fan_out) in enumerate(zip(sizes[:-1], sizes[1:]), start=1):
        params[f"w{idx}"] = xavier_uniform(keys[idx - 1], fan_in, fan_out)
        params[f"b{idx}"] = jnp.zeros((1, fan_out), dtype=jnp.float32)
    return params


def dqn_forward_ref(x, params):
    """Pure-JAX f32 reference for correctness checking."""
    h = jnp.maximum(x @ params["w1"] + params["b1"], 0.0)
    h = jnp.maximum(h @ params["w2"] + params["b2"], 0.0)
    h = jnp.maximum(h @ params["w3"] + params["b3"], 0.0)
    q = h @ params["w4"] + params["b4"]
    return q[:, 0]


if __name__ == "__main__":
    key = jax.random.PRNGKey(0)
    k_params, k_state, k_dest, k_trans = jax.random.split(key, 4)

    # Small, module-consistent shapes.
    state_size = 30
    action_size = 2
    batch = 8
    hidden_layers = (512, 256, 128)

    params = init_dqn_params(k_params, state_size, action_size, hidden_layers)

    # Build deterministic [state, action] pairs (mirrors encode_actions_batch:
    # destination / MAX_NODE_ID and transport / NUM_TRANSPORT_TYPES).
    MAX_NODE_ID = 200.0
    NUM_TRANSPORT_TYPES = 4.0
    states = jax.random.normal(k_state, (batch, state_size), dtype=jnp.float32)
    destinations = jax.random.randint(k_dest, (batch,), 1, 200).astype(jnp.float32)
    transports = jax.random.randint(k_trans, (batch,), 1, 5).astype(jnp.float32)
    actions = jnp.stack(
        [destinations / MAX_NODE_ID, transports / NUM_TRANSPORT_TYPES], axis=1)
    state_action_pairs = jnp.concatenate([states, actions], axis=1)  # [B, 32]

    q_pallas = dqn_forward(state_action_pairs, params, tm=256)
    q_pallas = jax.block_until_ready(q_pallas)

    q_ref = dqn_forward_ref(state_action_pairs, params)
    assert q_pallas.shape == (batch,)
    # bf16 MXU operands with f32 accumulation vs. pure-f32 reference.
    assert jnp.allclose(q_pallas, q_ref, atol=2e-2, rtol=5e-2), (
        f"mismatch: {q_pallas} vs {q_ref}")

    print("KERNEL_OK")
</pallas_src>

<mosaic_0001>
module attributes {stable_mosaic.version = 11 : i64} {
  func.func @_dqn_kernel(%arg0: i32, %arg1: memref<256x32xf32, #tpu.memory_space<vmem>>, %arg2: memref<32x512xbf16, #tpu.memory_space<vmem>>, %arg3: memref<1x512xf32, #tpu.memory_space<vmem>>, %arg4: memref<512x256xbf16, #tpu.memory_space<vmem>>, %arg5: memref<1x256xf32, #tpu.memory_space<vmem>>, %arg6: memref<256x128xbf16, #tpu.memory_space<vmem>>, %arg7: memref<1x128xf32, #tpu.memory_space<vmem>>, %arg8: memref<1x128xbf16, #tpu.memory_space<vmem>>, %arg9: memref<1x1xf32, #tpu.memory_space<smem>>, %arg10: memref<1x256xf32, #tpu.memory_space<vmem>>) attributes {dimension_semantics = [#tpu.dimension_semantics<parallel>], iteration_bounds = array<i64: 1>, scalar_prefetch = 0 : i64, scratch_operands = 0 : i64, tpu.core_type = #tpu.core_type<tc>, window_params = [{transform_indices = @transform_0, window_bounds = array<i64: 256, 32>}, {pipeline_mode = #tpu.pipeline_mode<synchronous>, transform_indices = @transform_1, window_bounds = array<i64: 32, 512>}, {pipeline_mode = #tpu.pipeline_mode<synchronous>, transform_indices = @transform_2, window_bounds = array<i64: 1, 512>}, {pipeline_mode = #tpu.pipeline_mode<synchronous>, transform_indices = @transform_3, window_bounds = array<i64: 512, 256>}, {pipeline_mode = #tpu.pipeline_mode<synchronous>, transform_indices = @transform_4, window_bounds = array<i64: 1, 256>}, {pipeline_mode = #tpu.pipeline_mode<synchronous>, transform_indices = @transform_5, window_bounds = array<i64: 256, 128>}, {pipeline_mode = #tpu.pipeline_mode<synchronous>, transform_indices = @transform_6, window_bounds = array<i64: 1, 128>}, {pipeline_mode = #tpu.pipeline_mode<synchronous>, transform_indices = @transform_7, window_bounds = array<i64: 1, 128>}, {transform_indices = @transform_8, window_bounds = array<i64: 1, 1>}, {transform_indices = @transform_9, window_bounds = array<i64: 1, 256>}]} {
    %c0 = arith.constant 0 : index
    %c0_0 = arith.constant 0 : index
    %0 = vector.load %arg1[%c0, %c0_0] : memref<256x32xf32, #tpu.memory_space<vmem>>, vector<256x32xf32>
    %1 = arith.truncf %0 : vector<256x32xf32> to vector<256x32xbf16>
    %c0_1 = arith.constant 0 : index
    %c0_2 = arith.constant 0 : index
    %2 = vector.load %arg2[%c0_1, %c0_2] : memref<32x512xbf16, #tpu.memory_space<vmem>>, vector<32x512xbf16>
    %cst = arith.constant dense<0.000000e+00> : vector<256x512xf32>
    %3 = tpu.matmul %1, %2, %cst {dimension_numbers = #tpu.dot_dimension_numbers<[1], [0], [0], [1], [0, 0, 1, 1], [], []>} : vector<256x32xbf16>, vector<32x512xbf16>, vector<256x512xf32> -> vector<256x512xf32>
    %c0_3 = arith.constant 0 : index
    %c0_4 = arith.constant 0 : index
    %4 = vector.load %arg3[%c0_3, %c0_4] : memref<1x512xf32, #tpu.memory_space<vmem>>, vector<1x512xf32>
    %5 = vector.broadcast %4 : vector<1x512xf32> to vector<256x512xf32>
    %6 = arith.addf %3, %5 : vector<256x512xf32>
    %cst_5 = arith.constant 0.000000e+00 : f32
    %7 = vector.broadcast %cst_5 : f32 to vector<256x512xf32>
    %8 = arith.maximumf %6, %7 : vector<256x512xf32>
    %9 = arith.truncf %8 : vector<256x512xf32> to vector<256x512xbf16>
    %c0_6 = arith.constant 0 : index
    %c0_7 = arith.constant 0 : index
    %10 = vector.load %arg4[%c0_6, %c0_7] : memref<512x256xbf16, #tpu.memory_space<vmem>>, vector<512x256xbf16>
    %cst_8 = arith.constant dense<0.000000e+00> : vector<256x256xf32>
    %11 = tpu.matmul %9, %10, %cst_8 {dimension_numbers = #tpu.dot_dimension_numbers<[1], [0], [0], [1], [0, 0, 1, 1], [], []>} : vector<256x512xbf16>, vector<512x256xbf16>, vector<256x256xf32> -> vector<256x256xf32>
    %c0_9 = arith.constant 0 : index
    %c0_10 = arith.constant 0 : index
    %12 = vector.load %arg5[%c0_9, %c0_10] : memref<1x256xf32, #tpu.memory_space<vmem>>, vector<1x256xf32>
    %13 = vector.broadcast %12 : vector<1x256xf32> to vector<256x256xf32>
    %14 = arith.addf %11, %13 : vector<256x256xf32>
    %cst_11 = arith.constant 0.000000e+00 : f32
    %15 = vector.broadcast %cst_11 : f32 to vector<256x256xf32>
    %16 = arith.maximumf %14, %15 : vector<256x256xf32>
    %17 = arith.truncf %16 : vector<256x256xf32> to vector<256x256xbf16>
    %c0_12 = arith.constant 0 : index
    %c0_13 = arith.constant 0 : index
    %18 = vector.load %arg6[%c0_12, %c0_13] : memref<256x128xbf16, #tpu.memory_space<vmem>>, vector<256x128xbf16>
    %cst_14 = arith.constant dense<0.000000e+00> : vector<256x128xf32>
    %19 = tpu.matmul %17, %18, %cst_14 {dimension_numbers = #tpu.dot_dimension_numbers<[1], [0], [0], [1], [0, 0, 1, 1], [], []>} : vector<256x256xbf16>, vector<256x128xbf16>, vector<256x128xf32> -> vector<256x128xf32>
    %c0_15 = arith.constant 0 : index
    %c0_16 = arith.constant 0 : index
    %20 = vector.load %arg7[%c0_15, %c0_16] : memref<1x128xf32, #tpu.memory_space<vmem>>, vector<1x128xf32>
    %21 = vector.broadcast %20 : vector<1x128xf32> to vector<256x128xf32>
    %22 = arith.addf %19, %21 : vector<256x128xf32>
    %cst_17 = arith.constant 0.000000e+00 : f32
    %23 = vector.broadcast %cst_17 : f32 to vector<256x128xf32>
    %24 = arith.maximumf %22, %23 : vector<256x128xf32>
    %c0_18 = arith.constant 0 : index
    %c0_19 = arith.constant 0 : index
    %25 = vector.load %arg8[%c0_18, %c0_19] : memref<1x128xbf16, #tpu.memory_space<vmem>>, vector<1x128xbf16>
    %26 = arith.truncf %24 : vector<256x128xf32> to vector<256x128xbf16>
    %cst_20 = arith.constant dense<0.000000e+00> : vector<1x256xf32>
    %27 = tpu.matmul %25, %26, %cst_20 {dimension_numbers = #tpu.dot_dimension_numbers<[1], [1], [0], [0], [0, 0, 1, 0], [], []>} : vector<1x128xbf16>, vector<256x128xbf16>, vector<1x256xf32> -> vector<1x256xf32>
    %c0_21 = arith.constant 0 : index
    %c0_22 = arith.constant 0 : index
    %28 = memref.load %arg9[%c0_21, %c0_22] : memref<1x1xf32, #tpu.memory_space<smem>>
    %29 = vector.broadcast %28 : f32 to vector<1x256xf32>
    %30 = arith.addf %27, %29 : vector<1x256xf32>
    %c0_23 = arith.constant 0 : index
    %c0_24 = arith.constant 0 : index
    %31 = vector.load %arg10[%c0_23, %c0_24] : memref<1x256xf32, #tpu.memory_space<vmem>>, vector<1x256xf32>
    tpu.vector_store %arg10[%c0_23, %c0_24], %30 {strides = array<i32>} : memref<1x256xf32, #tpu.memory_space<vmem>>, vector<1x256xf32>,
    return
  }
  func.func @transform_0(%arg0: i32) -> (i32, i32) {
    %c0_i32 = arith.constant 0 : i32
    %c0_i32_0 = arith.constant 0 : i32
    return %arg0, %c0_i32 : i32, i32
  }
  func.func @transform_1(%arg0: i32) -> (i32, i32) {
    %c0_i32 = arith.constant 0 : i32
    %c0_i32_0 = arith.constant 0 : i32
    %c0_i32_1 = arith.constant 0 : i32
    return %c0_i32, %c0_i32_0 : i32, i32
  }
  func.func @transform_2(%arg0: i32) -> (i32, i32) {
    %c0_i32 = arith.constant 0 : i32
    %c0_i32_0 = arith.constant 0 : i32
    %c0_i32_1 = arith.constant 0 : i32
    return %c0_i32, %c0_i32_0 : i32, i32
  }
  func.func @transform_3(%arg0: i32) -> (i32, i32) {
    %c0_i32 = arith.constant 0 : i32
    %c0_i32_0 = arith.constant 0 : i32
    %c0_i32_1 = arith.constant 0 : i32
    return %c0_i32, %c0_i32_0 : i32, i32
  }
  func.func @transform_4(%arg0: i32) -> (i32, i32) {
    %c0_i32 = arith.constant 0 : i32
    %c0_i32_0 = arith.constant 0 : i32
    %c0_i32_1 = arith.constant 0 : i32
    return %c0_i32, %c0_i32_0 : i32, i32
  }
  func.func @transform_5(%arg0: i32) -> (i32, i32) {
    %c0_i32 = arith.constant 0 : i32
    %c0_i32_0 = arith.constant 0 : i32
    %c0_i32_1 = arith.constant 0 : i32
    return %c0_i32, %c0_i32_0 : i32, i32
  }
  func.func @transform_6(%arg0: i32) -> (i32, i32) {
    %c0_i32 = arith.constant 0 : i32
    %c0_i32_0 = arith.constant 0 : i32
    %c0_i32_1 = arith.constant 0 : i32
    return %c0_i32, %c0_i32_0 : i32, i32
  }
  func.func @transform_7(%arg0: i32) -> (i32, i32) {
    %c0_i32 = arith.constant 0 : i32
    %c0_i32_0 = arith.constant 0 : i32
    %c0_i32_1 = arith.constant 0 : i32
    return %c0_i32, %c0_i32_0 : i32, i32
  }
  func.func @transform_8(%arg0: i32) -> (i32, i32) {
    %c0_i32 = arith.constant 0 : i32
    %c0_i32_0 = arith.constant 0 : i32
    %c0_i32_1 = arith.constant 0 : i32
    return %c0_i32, %c0_i32_0 : i32, i32
  }
  func.func @transform_9(%arg0: i32) -> (i32, i32) {
    %c0_i32 = arith.constant 0 : i32
    %c0_i32_0 = arith.constant 0 : i32
    return %c0_i32, %arg0 : i32, i32
  }
}

</mosaic_0001>

<llo_original>
// kernel: tpu_custom_call.1
$region0: #{tpu_custom_call.1}
  #allocation0 [shape = 'u32[]', space=smem, size = 0x4, offset = 0x4, fixed_abs, tag = 'smem constant byte address 0x4 - core index']
  #allocation1 [shape = 'u32[72,128]{1,0:T(1,128)}', space=vmem, size = 0x9000, scoped, tag = 'internal scratch']
  #allocation2 [shape = 'f32[1,1]{1,0:T(1,128)S(6)}', space=smem, size = 0x200, scoped, tag = 'scoped memory for tpu_custom_call.1']
  %s0 = inlined_call_operand.vmem [shape: f32[256,32], index: 0, kind: input, shape index: {}]
  %s1 = inlined_call_operand.vmem [shape: bf16[32,512], index: 1, kind: input, shape index: {}]
  %s2 = inlined_call_operand.vmem [shape: f32[1,512], index: 2, kind: input, shape index: {}]
  %s3 = inlined_call_operand.hbm [shape: bf16[512,256], index: 3, kind: input, shape index: {}]
  %s4 = inlined_call_operand.vmem [shape: f32[1,256], index: 4, kind: input, shape index: {}]
  %s5 = inlined_call_operand.vmem [shape: bf16[256,128], index: 5, kind: input, shape index: {}]
  %s6 = inlined_call_operand.vmem [shape: f32[1,128], index: 6, kind: input, shape index: {}]
  %s7 = inlined_call_operand.vmem [shape: bf16[1,128], index: 7, kind: input, shape index: {}]
  %s8 = inlined_call_operand.<no memory space> [shape: f32[1,1], index: 8, kind: input, shape index: {}]
  %s9 = inlined_call_operand.hbm [shape: f32[1,256], index: 9, kind: output, shape index: {}]
  %s10 = sld [smem:[#allocation0]]
  $region50: #{tpu_custom_call.1} parent=0
    _
  %s12 = ssub.s32 1, %s10
  %s13 = scalar_select 0, %s12, %s10
  %14 = sst [smem:[#allocation2]] %s8
  $region1: #{tpu_custom_call.1} parent=0
    #allocation3 [shape = 'u8[262144]{0}', space=vmem, size = 0x40000, scoped, tag = 'input window, operand 3, single buffered']
    #allocation4 [shape = 's32[1]{0}', space=sflag, size = 0x4, scoped, tag = 'scoped memory for tpu_custom_call.1']
    #allocation5 [shape = 's32[1]{0}', space=sflag, size = 0x4, scoped, tag = 'scoped memory for tpu_custom_call.1']
    #allocation6 [shape = 'u8[1024]{0}', space=vmem, size = 0x400, scoped, tag = 'output window, operand 0, single buffered']
    %15 = vsyncpa [#allocation4], 0
    %16 = vsyncpa [#allocation5], 0
    // Predicated region
    $region2: #{tpu_custom_call.1} parent=1 // pred_check
      _
    $region3: #{tpu_custom_call.1} parent=1 // pred_check_branch
      %18 = sbr.rel (0) target = $region5
    $region4: #{tpu_custom_call.1} parent=1 // pred_region
      _
    $region5: #{tpu_custom_call.1} parent=1 // pred_fallthru
      _
    // Predicated region
    $region6: #{tpu_custom_call.1} parent=1 // pred_check
      _
    $region7: #{tpu_custom_call.1} parent=1 // pred_check_branch
      %20 = sbr.rel (0) target = $region9
    $region8: #{tpu_custom_call.1} parent=1 // pred_region
      _
    $region9: #{tpu_custom_call.1} parent=1 // pred_fallthru
      _
    // Predicated region
    $region10: #{tpu_custom_call.1} parent=1 // pred_check
      _
    $region11: #{tpu_custom_call.1} parent=1 // pred_check_branch
      %22 = sbr.rel (0) target = $region13
    $region12: #{tpu_custom_call.1} parent=1 // pred_region
      _
    $region13: #{tpu_custom_call.1} parent=1 // pred_fallthru
      _
    // Predicated region
    $region14: #{tpu_custom_call.1} parent=1 // pred_check
      _
    $region15: #{tpu_custom_call.1} parent=1 // pred_check_branch
      %24 = sbr.rel (0) target = $region17
    $region16: #{tpu_custom_call.1} parent=1 // pred_region
      %26 = vsyncadd [#allocation4], 0
      %s27 = sshll.u32 %s3, 4
      %s28 = int_to_ptr.hbm [resolvable:$true] %s27
      %s29 = sshll.u32 [#allocation3], 4
      %s30 = int_to_ptr.vmem [resolvable:$true] %s29
      %35 = dma.hbm_to_vmem [thread:$0]  %s28, 8192, %s30, [#allocation4], 128, 128, 8
    $region17: #{tpu_custom_call.1} parent=1 // pred_fallthru
      _
    // Predicated region
    $region18: #{tpu_custom_call.1} parent=1 // pred_check
      _
    $region19: #{tpu_custom_call.1} parent=1 // pred_check_branch
      %37 = sbr.rel (0) target = $region21
    $region20: #{tpu_custom_call.1} parent=1 // pred_region
      _
    $region21: #{tpu_custom_call.1} parent=1 // pred_fallthru
      _
    // Predicated region
    $region22: #{tpu_custom_call.1} parent=1 // pred_check
      _
    $region23: #{tpu_custom_call.1} parent=1 // pred_check_branch
      %39 = sbr.rel (0) target = $region25
    $region24: #{tpu_custom_call.1} parent=1 // pred_region
      _
    $region25: #{tpu_custom_call.1} parent=1 // pred_fallthru
      _
    // Predicated region
    $region26: #{tpu_custom_call.1} parent=1 // pred_check
      _
    $region27: #{tpu_custom_call.1} parent=1 // pred_check_branch
      %41 = sbr.rel (0) target = $region29
    $region28: #{tpu_custom_call.1} parent=1 // pred_region
      _
    $region29: #{tpu_custom_call.1} parent=1 // pred_fallthru
      _
    // Predicated region
    $region30: #{tpu_custom_call.1} parent=1 // pred_check
      _
    $region31: #{tpu_custom_call.1} parent=1 // pred_check_branch
      %43 = sbr.rel (0) target = $region33
    $region32: #{tpu_custom_call.1} parent=1 // pred_region
      _
    $region33: #{tpu_custom_call.1} parent=1 // pred_fallthru
      _
    // Predicated region
    $region34: #{tpu_custom_call.1} parent=1 // pred_check
      _
    $region35: #{tpu_custom_call.1} parent=1 // pred_check_branch
      %45 = sbr.rel (0) target = $region37
    $region36: #{tpu_custom_call.1} parent=1 // pred_region
      _
    $region37: #{tpu_custom_call.1} parent=1 // pred_fallthru
      _
    // Predicated region
    $region38: #{tpu_custom_call.1} parent=1 // pred_check
      _
    $region39: #{tpu_custom_call.1} parent=1 // pred_check_branch
      %47 = sbr.rel (0) target = $region41
    $region40: #{tpu_custom_call.1} parent=1 // pred_region
      %49 = dma.done [#allocation4], 8192
    $region41: #{tpu_custom_call.1} parent=1 // pred_fallthru
      _
    %v51 = vld [vmem:[%s0] sm:$0xff]
    %v52 = vld [vmem:[%s0 + $0x8] sm:$0xff]
    %v53 = vld [vmem:[%s0 + $0x10] sm:$0xff]
    %v54 = vld [vmem:[%s0 + $0x18] sm:$0xff]
    %v55 = vld [vmem:[%s0 + $0x20] sm:$0xff]
    %v56 = vld [vmem:[%s0 + $0x28] sm:$0xff]
    %v57 = vld [vmem:[%s0 + $0x30] sm:$0xff]
    %v58 = vld [vmem:[%s0 + $0x38] sm:$0xff]
    %v59 = vld [vmem:[%s0 + $0x40] sm:$0xff]
    %v60 = vld [vmem:[%s0 + $0x48] sm:$0xff]
    %v61 = vld [vmem:[%s0 + $0x50] sm:$0xff]
    %v62 = vld [vmem:[%s0 + $0x58] sm:$0xff]
    %v63 = vld [vmem:[%s0 + $0x60] sm:$0xff]
    %v64 = vld [vmem:[%s0 + $0x68] sm:$0xff]
    %v65 = vld [vmem:[%s0 + $0x70] sm:$0xff]
    %v66 = vld [vmem:[%s0 + $0x78] sm:$0xff]
    %v67 = vld [vmem:[%s0 + $0x80] sm:$0xff]
    %v68 = vld [vmem:[%s0 + $0x88] sm:$0xff]
    %v69 = vld [vmem:[%s0 + $0x90] sm:$0xff]
    %v70 = vld [vmem:[%s0 + $0x98] sm:$0xff]
    %v71 = vld [vmem:[%s0 + $0xa0] sm:$0xff]
    %v72 = vld [vmem:[%s0 + $0xa8] sm:$0xff]
    %v73 = vld [vmem:[%s0 + $0xb0] sm:$0xff]
    %v74 = vld [vmem:[%s0 + $0xb8] sm:$0xff]
    %v75 = vld [vmem:[%s0 + $0xc0] sm:$0xff]
    %v76 = vld [vmem:[%s0 + $0xc8] sm:$0xff]
    %v77 = vld [vmem:[%s0 + $0xd0] sm:$0xff]
    %v78 = vld [vmem:[%s0 + $0xd8] sm:$0xff]
    %v79 = vld [vmem:[%s0 + $0xe0] sm:$0xff]
    %v80 = vld [vmem:[%s0 + $0xe8] sm:$0xff]
    %v81 = vld [vmem:[%s0 + $0xf0] sm:$0xff]
    %v82 = vld [vmem:[%s0 + $0xf8] sm:$0xff]
    %v83 = vpack.c.bf16 %v52, %v51
    %v84 = vpack.c.bf16 %v54, %v53
    %v85 = vpack.c.bf16 %v56, %v55
    %v86 = vpack.c.bf16 %v58, %v57
    %v87 = vpack.c.bf16 %v60, %v59
    %v88 = vpack.c.bf16 %v62, %v61
    %v89 = vpack.c.bf16 %v64, %v63
    %v90 = vpack.c.bf16 %v66, %v65
    %v91 = vpack.c.bf16 %v68, %v67
    %v92 = vpack.c.bf16 %v70, %v69
    %v93 = vpack.c.bf16 %v72, %v71
    %v94 = vpack.c.bf16 %v74, %v73
    %v95 = vpack.c.bf16 %v76, %v75
    %v96 = vpack.c.bf16 %v78, %v77
    %v97 = vpack.c.bf16 %v80, %v79
    %v98 = vpack.c.bf16 %v82, %v81
    %v99 = vld [vmem:[%s1] sm:$0xff]
    %v100 = vld [vmem:[%s1 + $0x8] sm:$0xff]
    %v101 = vld [vmem:[%s1 + $0x10] sm:$0xff]
    %v102 = vld [vmem:[%s1 + $0x18] sm:$0xff]
    %v103 = vld [vmem:[%s1 + $0x20] sm:$0xff]
    %v104 = vld [vmem:[%s1 + $0x28] sm:$0xff]
    %v105 = vld [vmem:[%s1 + $0x30] sm:$0xff]
    %v106 = vld [vmem:[%s1 + $0x38] sm:$0xff]
    %v107 = vld [vmem:[%s2] sm:$0xf]
    %v109 = vperm.slane %v107, 0
    %v110 = vperm.slane %v107, 1
    %v111 = vperm.slane %v107, 2
    %v112 = vperm.slane %v107, 3
    %v125 = vunpack.c.l.b16 %v99
    %v126 = vunpack.c.h.b16 %v99
    %v127 = vunpack.c.l.b16 %v100
    %v128 = vunpack.c.h.b16 %v100
    %v129 = vunpack.c.l.b16 %v101
    %v130 = vunpack.c.h.b16 %v101
    %v131 = vunpack.c.l.b16 %v102
    %v132 = vunpack.c.h.b16 %v102
    %v133 = vunpack.c.l.b16 %v103
    %v134 = vunpack.c.h.b16 %v103
    %v135 = vunpack.c.l.b16 %v104
    %v136 = vunpack.c.h.b16 %v104
    %v137 = vunpack.c.l.b16 %v105
    %v138 = vunpack.c.h.b16 %v105
    %v139 = vunpack.c.l.b16 %v106
    %v140 = vunpack.c.h.b16 %v106
    %v141 = vpack.c.b16 %v129, %v125
    %v142 = vpack.c.b16 %v130, %v126
    %v143 = vpack.c.b16 %v131, %v127
    %v144 = vpack.c.b16 %v132, %v128
    %v145 = vpack.c.b16 %v137, %v133
    %v146 = vpack.c.b16 %v138, %v134
    %v147 = vpack.c.b16 %v139, %v135
    %v148 = vpack.c.b16 %v140, %v136
    %vm157 = vcmask 261120
    %v159 = vsel %vm157, %v83, 0
    %v162 = vsel %vm157, %v84, 0
    %v165 = vsel %vm157, %v85, 0
    %v168 = vsel %vm157, %v86, 0
    %v171 = vsel %vm157, %v87, 0
    %v174 = vsel %vm157, %v88, 0
    %v177 = vsel %vm157, %v89, 0
    %v180 = vsel %vm157, %v90, 0
    %v183 = vsel %vm157, %v91, 0
    %v186 = vsel %vm157, %v92, 0
    %v189 = vsel %vm157, %v93, 0
    %v192 = vsel %vm157, %v94, 0
    %v195 = vsel %vm157, %v95, 0
    %v198 = vsel %vm157, %v96, 0
    %v201 = vsel %vm157, %v97, 0
    %v204 = vsel %vm157, %v98, 0
    %206 = vmatpush.bf16.msra.mxu0 0
    %207 = vmatpush.bf16.msra.mxu0 0
    %208 = vmatpush.bf16.msra.mxu0 0
    %209 = vmatpush.bf16.msra.mxu0 0
    %210 = vmatpush.bf16.msra.mxu0 0
    %211 = vmatpush.bf16.msra.mxu0 0
    %212 = vmatpush.bf16.msra.mxu0 %v145
    %213 = vmatpush.bf16.msra.mxu0 %v141
    %214 = vmatmul.bf16.gmra.mxu0 %v159
    %v215 = vpop.f32.mrf.mxu0
    %v216 = vadd.f32 %v109, %v215
    %v217 = vpop.f32.mrf.mxu0
    %v218 = vadd.f32 %v109, %v217
    %219 = vmatmul.bf16.gmra.mxu0 %v162
    %v220 = vpop.f32.mrf.mxu0
    %v221 = vadd.f32 %v109, %v220
    %v222 = vpop.f32.mrf.mxu0
    %v223 = vadd.f32 %v109, %v222
    %224 = vmatmul.bf16.gmra.mxu0 %v165
    %v225 = vpop.f32.mrf.mxu0
    %v226 = vadd.f32 %v109, %v225
    %v227 = vpop.f32.mrf.mxu0
    %v228 = vadd.f32 %v109, %v227
    %229 = vmatmul.bf16.gmra.mxu0 %v168
    %v230 = vpop.f32.mrf.mxu0
    %v231 = vadd.f32 %v109, %v230
    %v232 = vpop.f32.mrf.mxu0
    %v233 = vadd.f32 %v109, %v232
    %234 = vmatmul.bf16.gmra.mxu0 %v171
    %v235 = vpop.f32.mrf.mxu0
    %v236 = vadd.f32 %v109, %v235
    %v237 = vpop.f32.mrf.mxu0
    %v238 = vadd.f32 %v109, %v237
    %239 = vmatmul.bf16.gmra.mxu0 %v174
    %v240 = vpop.f32.mrf.mxu0
    %v241 = vadd.f32 %v109, %v240
    %v242 = vpop.f32.mrf.mxu0
    %v243 = vadd.f32 %v109, %v242
    %244 = vmatmul.bf16.gmra.mxu0 %v177
    %v245 = vpop.f32.mrf.mxu0
    %v246 = vadd.f32 %v109, %v245
    %v247 = vpop.f32.mrf.mxu0
    %v248 = vadd.f32 %v109, %v247
    %249 = vmatmul.bf16.gmra.mxu0 %v180
    %v250 = vpop.f32.mrf.mxu0
    %v251 = vadd.f32 %v109, %v250
    %v252 = vpop.f32.mrf.mxu0
    %v253 = vadd.f32 %v109, %v252
    %254 = vmatmul.bf16.gmra.mxu0 %v183
    %v255 = vpop.f32.mrf.mxu0
    %v256 = vadd.f32 %v109, %v255
    %v257 = vpop.f32.mrf.mxu0
    %v258 = vadd.f32 %v109, %v257
    %259 = vmatmul.bf16.gmra.mxu0 %v186
    %v260 = vpop.f32.mrf.mxu0
    %v261 = vadd.f32 %v109, %v260
    %v262 = vpop.f32.mrf.mxu0
    %v263 = vadd.f32 %v109, %v262
    %264 = vmatmul.bf16.gmra.mxu0 %v189
    %v265 = vpop.f32.mrf.mxu0
    %v266 = vadd.f32 %v109, %v265
    %v267 = vpop.f32.mrf.mxu0
    %v268 = vadd.f32 %v109, %v267
    %269 = vmatmul.bf16.gmra.mxu0 %v192
    %v270 = vpop.f32.mrf.mxu0
    %v271 = vadd.f32 %v109, %v270
    %v272 = vpop.f32.mrf.mxu0
    %v273 = vadd.f32 %v109, %v272
    %274 = vmatmul.bf16.gmra.mxu0 %v195
    %v275 = vpop.f32.mrf.mxu0
    %v276 = vadd.f32 %v109, %v275
    %v277 = vpop.f32.mrf.mxu0
    %v278 = vadd.f32 %v109, %v277
    %279 = vmatmul.bf16.gmra.mxu0 %v198
    %v280 = vpop.f32.mrf.mxu0
    %v281 = vadd.f32 %v109, %v280
    %v282 = vpop.f32.mrf.mxu0
    %v283 = vadd.f32 %v109, %v282
    %284 = vmatmul.bf16.gmra.mxu0 %v201
    %v285 = vpop.f32.mrf.mxu0
    %v286 = vadd.f32 %v109, %v285
    %v287 = vpop.f32.mrf.mxu0
    %v288 = vadd.f32 %v109, %v287
    %289 = vmatmul.bf16.gmra.mxu0 %v204
    %v290 = vpop.f32.mrf.mxu0
    %v291 = vadd.f32 %v109, %v290
    %v292 = vpop.f32.mrf.mxu0
    %v293 = vadd.f32 %v109, %v292
    %294 = vdwg.mxu0
    %295 = vmatpush.bf16.msra.mxu0 0
    %296 = vmatpush.bf16.msra.mxu0 0
    %297 = vmatpush.bf16.msra.mxu0 0
    %298 = vmatpush.bf16.msra.mxu0 0
    %299 = vmatpush.bf16.msra.mxu0 0
    %300 = vmatpush.bf16.msra.mxu0 0
    %301 = vmatpush.bf16.msra.mxu0 %v146
    %302 = vmatpush.bf16.msra.mxu0 %v142
    %303 = vmatmul.bf16.gmra.mxu0 %v159
    %v304 = vpop.f32.mrf.mxu0
    %v305 = vadd.f32 %v110, %v304
    %v306 = vpop.f32.mrf.mxu0
    %v307 = vadd.f32 %v110, %v306
    %308 = vmatmul.bf16.gmra.mxu0 %v162
    %v309 = vpop.f32.mrf.mxu0
    %v310 = vadd.f32 %v110, %v309
    %v311 = vpop.f32.mrf.mxu0
    %v312 = vadd.f32 %v110, %v311
    %313 = vmatmul.bf16.gmra.mxu0 %v165
    %v314 = vpop.f32.mrf.mxu0
    %v315 = vadd.f32 %v110, %v314
    %v316 = vpop.f32.mrf.mxu0
    %v317 = vadd.f32 %v110, %v316
    %318 = vmatmul.bf16.gmra.mxu0 %v168
    %v319 = vpop.f32.mrf.mxu0
    %v320 = vadd.f32 %v110, %v319
    %v321 = vpop.f32.mrf.mxu0
    %v322 = vadd.f32 %v110, %v321
    %323 = vmatmul.bf16.gmra.mxu0 %v171
    %v324 = vpop.f32.mrf.mxu0
    %v325 = vadd.f32 %v110, %v324
    %v326 = vpop.f32.mrf.mxu0
    %v327 = vadd.f32 %v110, %v326
    %328 = vmatmul.bf16.gmra.mxu0 %v174
    %v329 = vpop.f32.mrf.mxu0
    %v330 = vadd.f32 %v110, %v329
    %v331 = vpop.f32.mrf.mxu0
    %v332 = vadd.f32 %v110, %v331
    %333 = vmatmul.bf16.gmra.mxu0 %v177
    %v334 = vpop.f32.mrf.mxu0
    %v335 = vadd.f32 %v110, %v334
    %v336 = vpop.f32.mrf.mxu0
    %v337 = vadd.f32 %v110, %v336
    %338 = vmatmul.bf16.gmra.mxu0 %v180
    %v339 = vpop.f32.mrf.mxu0
    %v340 = vadd.f32 %v110, %v339
    %v341 = vpop.f32.mrf.mxu0
    %v342 = vadd.f32 %v110, %v341
    %343 = vmatmul.bf16.gmra.mxu0 %v183
    %v344 = vpop.f32.mrf.mxu0
    %v345 = vadd.f32 %v110, %v344
    %v346 = vpop.f32.mrf.mxu0
    %v347 = vadd.f32 %v110, %v346
    %348 = vmatmul.bf16.gmra.mxu0 %v186
    %v349 = vpop.f32.mrf.mxu0
    %v350 = vadd.f32 %v110, %v349
    %v351 = vpop.f32.mrf.mxu0
    %v352 = vadd.f32 %v110, %v351
    %353 = vmatmul.bf16.gmra.mxu0 %v189
    %v354 = vpop.f32.mrf.mxu0
    %v355 = vadd.f32 %v110, %v354
    %v356 = vpop.f32.mrf.mxu0
    %v357 = vadd.f32 %v110, %v356
    %358 = vmatmul.bf16.gmra.mxu0 %v192
    %v359 = vpop.f32.mrf.mxu0
    %v360 = vadd.f32 %v110, %v359
    %v361 = vpop.f32.mrf.mxu0
    %v362 = vadd.f32 %v110, %v361
    %363 = vmatmul.bf16.gmra.mxu0 %v195
    %v364 = vpop.f32.mrf.mxu0
    %v365 = vadd.f32 %v110, %v364
    %v366 = vpop.f32.mrf.mxu0
    %v367 = vadd.f32 %v110, %v366
    %368 = vmatmul.bf16.gmra.mxu0 %v198
    %v369 = vpop.f32.mrf.mxu0
    %v370 = vadd.f32 %v110, %v369
    %v371 = vpop.f32.mrf.mxu0
    %v372 = vadd.f32 %v110, %v371
    %373 = vmatmul.bf16.gmra.mxu0 %v201
    %v374 = vpop.f32.mrf.mxu0
    %v375 = vadd.f32 %v110, %v374
    %v376 = vpop.f32.mrf.mxu0
    %v377 = vadd.f32 %v110, %v376
    %378 = vmatmul.bf16.gmra.mxu0 %v204
    %v379 = vpop.f32.mrf.mxu0
    %v380 = vadd.f32 %v110, %v379
    %v381 = vpop.f32.mrf.mxu0
    %v382 = vadd.f32 %v110, %v381
    %383 = vdwg.mxu0
    %384 = vmatpush.bf16.msra.mxu0 0
    %385 = vmatpush.bf16.msra.mxu0 0
    %386 = vmatpush.bf16.msra.mxu0 0
    %387 = vmatpush.bf16.msra.mxu0 0
    %388 = vmatpush.bf16.msra.mxu0 0
    %389 = vmatpush.bf16.msra.mxu0 0
    %390 = vmatpush.bf16.msra.mxu0 %v147
    %391 = vmatpush.bf16.msra.mxu0 %v143
    %392 = vmatmul.bf16.gmra.mxu0 %v159
    %v393 = vpop.f32.mrf.mxu0
    %v394 = vadd.f32 %v111, %v393
    %v395 = vpop.f32.mrf.mxu0
    %v396 = vadd.f32 %v111, %v395
    %397 = vmatmul.bf16.gmra.mxu0 %v162
    %v398 = vpop.f32.mrf.mxu0
    %v399 = vadd.f32 %v111, %v398
    %v400 = vpop.f32.mrf.mxu0
    %v401 = vadd.f32 %v111, %v400
    %402 = vmatmul.bf16.gmra.mxu0 %v165
    %v403 = vpop.f32.mrf.mxu0
    %v404 = vadd.f32 %v111, %v403
    %v405 = vpop.f32.mrf.mxu0
    %v406 = vadd.f32 %v111, %v405
    %407 = vmatmul.bf16.gmra.mxu0 %v168
    %v408 = vpop.f32.mrf.mxu0
    %v409 = vadd.f32 %v111, %v408
    %v410 = vpop.f32.mrf.mxu0
    %v411 = vadd.f32 %v111, %v410
    %412 = vmatmul.bf16.gmra.mxu0 %v171
    %v413 = vpop.f32.mrf.mxu0
    %v414 = vadd.f32 %v111, %v413
    %v415 = vpop.f32.mrf.mxu0
    %v416 = vadd.f32 %v111, %v415
    %417 = vmatmul.bf16.gmra.mxu0 %v174
    %v418 = vpop.f32.mrf.mxu0
    %v419 = vadd.f32 %v111, %v418
    %v420 = vpop.f32.mrf.mxu0
    %v421 = vadd.f32 %v111, %v420
    %422 = vmatmul.bf16.gmra.mxu0 %v177
    %v423 = vpop.f32.mrf.mxu0
    %v424 = vadd.f32 %v111, %v423
    %v425 = vpop.f32.mrf.mxu0
    %v426 = vadd.f32 %v111, %v425
    %427 = vmatmul.bf16.gmra.mxu0 %v180
    %v428 = vpop.f32.mrf.mxu0
    %v429 = vadd.f32 %v111, %v428
    %v430 = vpop.f32.mrf.mxu0
    %v431 = vadd.f32 %v111, %v430
    %432 = vmatmul.bf16.gmra.mxu0 %v183
    %v433 = vpop.f32.mrf.mxu0
    %v434 = vadd.f32 %v111, %v433
    %v435 = vpop.f32.mrf.mxu0
    %v436 = vadd.f32 %v111, %v435
    %437 = vmatmul.bf16.gmra.mxu0 %v186
    %v438 = vpop.f32.mrf.mxu0
    %v439 = vadd.f32 %v111, %v438
    %v440 = vpop.f32.mrf.mxu0
    %v441 = vadd.f32 %v111, %v440
    %442 = vmatmul.bf16.gmra.mxu0 %v189
    %v443 = vpop.f32.mrf.mxu0
    %v444 = vadd.f32 %v111, %v443
    %v445 = vpop.f32.mrf.mxu0
    %v446 = vadd.f32 %v111, %v445
    %447 = vmatmul.bf16.gmra.mxu0 %v192
    %v448 = vpop.f32.mrf.mxu0
    %v449 = vadd.f32 %v111, %v448
    %v450 = vpop.f32.mrf.mxu0
    %v451 = vadd.f32 %v111, %v450
    %452 = vmatmul.bf16.gmra.mxu0 %v195
    %v453 = vpop.f32.mrf.mxu0
    %v454 = vadd.f32 %v111, %v453
    %v455 = vpop.f32.mrf.mxu0
    %v456 = vadd.f32 %v111, %v455
    %457 = vmatmul.bf16.gmra.mxu0 %v198
    %v458 = vpop.f32.mrf.mxu0
    %v459 = vadd.f32 %v111, %v458
    %v460 = vpop.f32.mrf.mxu0
    %v461 = vadd.f32 %v111, %v460
    %462 = vmatmul.bf16.gmra.mxu0 %v201
    %v463 = vpop.f32.mrf.mxu0
    %v464 = vadd.f32 %v111, %v463
    %v465 = vpop.f32.mrf.mxu0
    %v466 = vadd.f32 %v111, %v465
    %467 = vmatmul.bf16.gmra.mxu0 %v204
    %v468 = vpop.f32.mrf.mxu0
    %v469 = vadd.f32 %v111, %v468
    %v470 = vpop.f32.mrf.mxu0
    %v471 = vadd.f32 %v111, %v470
    %472 = vdwg.mxu0
    %473 = vmatpush.bf16.msra.mxu0 0
    %474 = vmatpush.bf16.msra.mxu0 0
    %475 = vmatpush.bf16.msra.mxu0 0
    %476 = vmatpush.bf16.msra.mxu0 0
    %477 = vmatpush.bf16.msra.mxu0 0
    %478 = vmatpush.bf16.msra.mxu0 0
    %479 = vmatpush.bf16.msra.mxu0 %v148
    %480 = vmatpush.bf16.msra.mxu0 %v144
    %481 = vmatmul.bf16.gmra.mxu0 %v159
    %v482 = vpop.f32.mrf.mxu0
    %v483 = vadd.f32 %v112, %v482
    %v484 = vpop.f32.mrf.mxu0
    %v485 = vadd.f32 %v112, %v484
    %486 = vmatmul.bf16.gmra.mxu0 %v162
    %v487 = vpop.f32.mrf.mxu0
    %v488 = vadd.f32 %v112, %v487
    %v489 = vpop.f32.mrf.mxu0
    %v490 = vadd.f32 %v112, %v489
    %491 = vmatmul.bf16.gmra.mxu0 %v165
    %v492 = vpop.f32.mrf.mxu0
    %v493 = vadd.f32 %v112, %v492
    %v494 = vpop.f32.mrf.mxu0
    %v495 = vadd.f32 %v112, %v494
    %496 = vmatmul.bf16.gmra.mxu0 %v168
    %v497 = vpop.f32.mrf.mxu0
    %v498 = vadd.f32 %v112, %v497
    %v499 = vpop.f32.mrf.mxu0
    %v500 = vadd.f32 %v112, %v499
    %501 = vmatmul.bf16.gmra.mxu0 %v171
    %v502 = vpop.f32.mrf.mxu0
    %v503 = vadd.f32 %v112, %v502
    %v504 = vpop.f32.mrf.mxu0
    %v505 = vadd.f32 %v112, %v504
    %506 = vmatmul.bf16.gmra.mxu0 %v174
    %v507 = vpop.f32.mrf.mxu0
    %v508 = vadd.f32 %v112, %v507
    %v509 = vpop.f32.mrf.mxu0
    %v510 = vadd.f32 %v112, %v509
    %511 = vmatmul.bf16.gmra.mxu0 %v177
    %v512 = vpop.f32.mrf.mxu0
    %v513 = vadd.f32 %v112, %v512
    %v514 = vpop.f32.mrf.mxu0
    %v515 = vadd.f32 %v112, %v514
    %516 = vmatmul.bf16.gmra.mxu0 %v180
    %v517 = vpop.f32.mrf.mxu0
    %v518 = vadd.f32 %v112, %v517
    %v519 = vpop.f32.mrf.mxu0
    %v520 = vadd.f32 %v112, %v519
    %521 = vmatmul.bf16.gmra.mxu0 %v183
    %v522 = vpop.f32.mrf.mxu0
    %v523 = vadd.f32 %v112, %v522
    %v524 = vpop.f32.mrf.mxu0
    %v525 = vadd.f32 %v112, %v524
    %526 = vmatmul.bf16.gmra.mxu0 %v186
    %v527 = vpop.f32.mrf.mxu0
    %v528 = vadd.f32 %v112, %v527
    %v529 = vpop.f32.mrf.mxu0
    %v530 = vadd.f32 %v112, %v529
    %531 = vmatmul.bf16.gmra.mxu0 %v189
    %v532 = vpop.f32.mrf.mxu0
    %v533 = vadd.f32 %v112, %v532
    %v534 = vpop.f32.mrf.mxu0
    %v535 = vadd.f32 %v112, %v534
    %536 = vmatmul.bf16.gmra.mxu0 %v192
    %v537 = vpop.f32.mrf.mxu0
    %v538 = vadd.f32 %v112, %v537
    %v539 = vpop.f32.mrf.mxu0
    %v540 = vadd.f32 %v112, %v539
    %541 = vmatmul.bf16.gmra.mxu0 %v195
    %v542 = vpop.f32.mrf.mxu0
    %v543 = vadd.f32 %v112, %v542
    %v544 = vpop.f32.mrf.mxu0
    %v545 = vadd.f32 %v112, %v544
    %546 = vmatmul.bf16.gmra.mxu0 %v198
    %v547 = vpop.f32.mrf.mxu0
    %v548 = vadd.f32 %v112, %v547
    %v549 = vpop.f32.mrf.mxu0
    %v550 = vadd.f32 %v112, %v549
    %551 = vmatmul.bf16.gmra.mxu0 %v201
    %v552 = vpop.f32.mrf.mxu0
    %v553 = vadd.f32 %v112, %v552
    %v554 = vpop.f32.mrf.mxu0
    %v555 = vadd.f32 %v112, %v554
    %556 = vmatmul.bf16.gmra.mxu0 %v204
    %v557 = vpop.f32.mrf.mxu0
    %v558 = vadd.f32 %v112, %v557
    %v559 = vpop.f32.mrf.mxu0
    %v560 = vadd.f32 %v112, %v559
    %561 = vdwg.mxu0
    %v562 = vmax.f32 %v216, 0.0
    %v563 = vmax.f32 %v305, 0.0
    %v564 = vmax.f32 %v394, 0.0
    %v565 = vmax.f32 %v483, 0.0
    %v566 = vmax.f32 %v218, 0.0
    %v567 = vmax.f32 %v307, 0.0
    %v568 = vmax.f32 %v396, 0.0
    %v569 = vmax.f32 %v485, 0.0
    %v570 = vmax.f32 %v221, 0.0
    %v571 = vmax.f32 %v310, 0.0
    %v572 = vmax.f32 %v399, 0.0
    %v573 = vmax.f32 %v488, 0.0
    %v574 = vmax.f32 %v223, 0.0
    %v575 = vmax.f32 %v312, 0.0
    %v576 = vmax.f32 %v401, 0.0
    %v577 = vmax.f32 %v490, 0.0
    %v578 = vmax.f32 %v226, 0.0
    %v579 = vmax.f32 %v315, 0.0
    %v580 = vmax.f32 %v404, 0.0
    %v581 = vmax.f32 %v493, 0.0
    %v582 = vmax.f32 %v228, 0.0
    %v583 = vmax.f32 %v317, 0.0
    %v584 = vmax.f32 %v406, 0.0
    %v585 = vmax.f32 %v495, 0.0
    %v586 = vmax.f32 %v231, 0.0
    %v587 = vmax.f32 %v320, 0.0
    %v588 = vmax.f32 %v409, 0.0
    %v589 = vmax.f32 %v498, 0.0
    %v590 = vmax.f32 %v233, 0.0
    %v591 = vmax.f32 %v322, 0.0
    %v592 = vmax.f32 %v411, 0.0
    %v593 = vmax.f32 %v500, 0.0
    %v594 = vmax.f32 %v236, 0.0
    %v595 = vmax.f32 %v325, 0.0
    %v596 = vmax.f32 %v414, 0.0
    %v597 = vmax.f32 %v503, 0.0
    %v598 = vmax.f32 %v238, 0.0
    %v599 = vmax.f32 %v327, 0.0
    %v600 = vmax.f32 %v416, 0.0
    %v601 = vmax.f32 %v505, 0.0
    %v602 = vmax.f32 %v241, 0.0
    %v603 = vmax.f32 %v330, 0.0
    %v604 = vmax.f32 %v419, 0.0
    %v605 = vmax.f32 %v508, 0.0
    %v606 = vmax.f32 %v243, 0.0
    %v607 = vmax.f32 %v332, 0.0
    %v608 = vmax.f32 %v421, 0.0
    %v609 = vmax.f32 %v510, 0.0
    %v610 = vmax.f32 %v246, 0.0
    %v611 = vmax.f32 %v335, 0.0
    %v612 = vmax.f32 %v424, 0.0
    %v613 = vmax.f32 %v513, 0.0
    %v614 = vmax.f32 %v248, 0.0
    %v615 = vmax.f32 %v337, 0.0
    %v616 = vmax.f32 %v426, 0.0
    %v617 = vmax.f32 %v515, 0.0
    %v618 = vmax.f32 %v251, 0.0
    %v619 = vmax.f32 %v340, 0.0
    %v620 = vmax.f32 %v429, 0.0
    %v621 = vmax.f32 %v518, 0.0
    %v622 = vmax.f32 %v253, 0.0
    %v623 = vmax.f32 %v342, 0.0
    %v624 = vmax.f32 %v431, 0.0
    %v625 = vmax.f32 %v520, 0.0
    %v626 = vmax.f32 %v256, 0.0
    %v627 = vmax.f32 %v345, 0.0
    %v628 = vmax.f32 %v434, 0.0
    %v629 = vmax.f32 %v523, 0.0
    %v630 = vmax.f32 %v258, 0.0
    %v631 = vmax.f32 %v347, 0.0
    %v632 = vmax.f32 %v436, 0.0
    %v633 = vmax.f32 %v525, 0.0
    %v634 = vmax.f32 %v261, 0.0
    %v635 = vmax.f32 %v350, 0.0
    %v636 = vmax.f32 %v439, 0.0
    %v637 = vmax.f32 %v528, 0.0
    %v638 = vmax.f32 %v263, 0.0
    %v639 = vmax.f32 %v352, 0.0
    %v640 = vmax.f32 %v441, 0.0
    %v641 = vmax.f32 %v530, 0.0
    %v642 = vmax.f32 %v266, 0.0
    %v643 = vmax.f32 %v355, 0.0
    %v644 = vmax.f32 %v444, 0.0
    %v645 = vmax.f32 %v533, 0.0
    %v646 = vmax.f32 %v268, 0.0
    %v647 = vmax.f32 %v357, 0.0
    %v648 = vmax.f32 %v446, 0.0
    %v649 = vmax.f32 %v535, 0.0
    %v650 = vmax.f32 %v271, 0.0
    %v651 = vmax.f32 %v360, 0.0
    %v652 = vmax.f32 %v449, 0.0
    %v653 = vmax.f32 %v538, 0.0
    %v654 = vmax.f32 %v273, 0.0
    %v655 = vmax.f32 %v362, 0.0
    %v656 = vmax.f32 %v451, 0.0
    %v657 = vmax.f32 %v540, 0.0
    %v658 = vmax.f32 %v276, 0.0
    %v659 = vmax.f32 %v365, 0.0
    %v660 = vmax.f32 %v454, 0.0
    %v661 = vmax.f32 %v543, 0.0
    %v662 = vmax.f32 %v278, 0.0
    %v663 = vmax.f32 %v367, 0.0
    %v664 = vmax.f32 %v456, 0.0
    %v665 = vmax.f32 %v545, 0.0
    %v666 = vmax.f32 %v281, 0.0
    %v667 = vmax.f32 %v370, 0.0
    %v668 = vmax.f32 %v459, 0.0
    %v669 = vmax.f32 %v548, 0.0
    %v670 = vmax.f32 %v283, 0.0
    %v671 = vmax.f32 %v372, 0.0
    %v672 = vmax.f32 %v461, 0.0
    %v673 = vmax.f32 %v550, 0.0
    %v674 = vmax.f32 %v286, 0.0
    %v675 = vmax.f32 %v375, 0.0
    %v676 = vmax.f32 %v464, 0.0
    %v677 = vmax.f32 %v553, 0.0
    %v678 = vmax.f32 %v288, 0.0
    %v679 = vmax.f32 %v377, 0.0
    %v680 = vmax.f32 %v466, 0.0
    %v681 = vmax.f32 %v555, 0.0
    %v682 = vmax.f32 %v291, 0.0
    %v683 = vmax.f32 %v380, 0.0
    %v684 = vmax.f32 %v469, 0.0
    %v685 = vmax.f32 %v558, 0.0
    %v686 = vmax.f32 %v293, 0.0
    %v687 = vmax.f32 %v382, 0.0
    %v688 = vmax.f32 %v471, 0.0
    %v689 = vmax.f32 %v560, 0.0
    %v690 = vpack.c.bf16 %v566, %v562
    %v691 = vpack.c.bf16 %v567, %v563
    %v692 = vpack.c.bf16 %v568, %v564
    %v693 = vpack.c.bf16 %v569, %v565
    %v694 = vpack.c.bf16 %v574, %v570
    %v695 = vpack.c.bf16 %v575, %v571
    %v696 = vpack.c.bf16 %v576, %v572
    %v697 = vpack.c.bf16 %v577, %v573
    %v698 = vpack.c.bf16 %v582, %v578
    %v699 = vpack.c.bf16 %v583, %v579
    %v700 = vpack.c.bf16 %v584, %v580
    %v701 = vpack.c.bf16 %v585, %v581
    %v702 = vpack.c.bf16 %v590, %v586
    %v703 = vpack.c.bf16 %v591, %v587
    %v704 = vpack.c.bf16 %v592, %v588
    %v705 = vpack.c.bf16 %v593, %v589
    %v706 = vpack.c.bf16 %v598, %v594
    %v707 = vpack.c.bf16 %v599, %v595
    %v708 = vpack.c.bf16 %v600, %v596
    %v709 = vpack.c.bf16 %v601, %v597
    %v710 = vpack.c.bf16 %v606, %v602
    %v711 = vpack.c.bf16 %v607, %v603
    %v712 = vpack.c.bf16 %v608, %v604
    %v713 = vpack.c.bf16 %v609, %v605
    %v714 = vpack.c.bf16 %v614, %v610
    %v715 = vpack.c.bf16 %v615, %v611
    %v716 = vpack.c.bf16 %v616, %v612
    %v717 = vpack.c.bf16 %v617, %v613
    %v718 = vpack.c.bf16 %v622, %v618
    %v719 = vpack.c.bf16 %v623, %v619
    %v720 = vpack.c.bf16 %v624, %v620
    %v721 = vpack.c.bf16 %v625, %v621
    %v722 = vpack.c.bf16 %v630, %v626
    %v723 = vpack.c.bf16 %v631, %v627
    %v724 = vpack.c.bf16 %v632, %v628
    %v725 = vpack.c.bf16 %v633, %v629
    %v726 = vpack.c.bf16 %v638, %v634
    %v727 = vpack.c.bf16 %v639, %v635
    %v728 = vpack.c.bf16 %v640, %v636
    %v729 = vpack.c.bf16 %v641, %v637
    %v730 = vpack.c.bf16 %v646, %v642
    %v731 = vpack.c.bf16 %v647, %v643
    %v732 = vpack.c.bf16 %v648, %v644
    %v733 = vpack.c.bf16 %v649, %v645
    %v734 = vpack.c.bf16 %v654, %v650
    %v735 = vpack.c.bf16 %v655, %v651
    %v736 = vpack.c.bf16 %v656, %v652
    %v737 = vpack.c.bf16 %v657, %v653
    %v738 = vpack.c.bf16 %v662, %v658
    %v739 = vpack.c.bf16 %v663, %v659
    %v740 = vpack.c.bf16 %v664, %v660
    %v741 = vpack.c.bf16 %v665, %v661
    %v742 = vpack.c.bf16 %v670, %v666
    %v743 = vpack.c.bf16 %v671, %v667
    %v744 = vpack.c.bf16 %v672, %v668
    %v745 = vpack.c.bf16 %v673, %v669
    %v746 = vpack.c.bf16 %v678, %v674
    %v747 = vpack.c.bf16 %v679, %v675
    %v748 = vpack.c.bf16 %v680, %v676
    %v749 = vpack.c.bf16 %v681, %v677
    %v750 = vpack.c.bf16 %v686, %v682
    %v751 = vpack.c.bf16 %v687, %v683
    %v752 = vpack.c.bf16 %v688, %v684
    %v753 = vpack.c.bf16 %v689, %v685
    %v754 = vld [vmem:[#allocation3] sm:$0xff]
    %v755 = vld [vmem:[#allocation3 + $0x8] sm:$0xff]
    %v756 = vld [vmem:[#allocation3 + $0x10] sm:$0xff]
    %v757 = vld [vmem:[#allocation3 + $0x18] sm:$0xff]
    %v758 = vld [vmem:[#allocation3 + $0x20] sm:$0xff]
    %v759 = vld [vmem:[#allocation3 + $0x28] sm:$0xff]
    %v760 = vld [vmem:[#allocation3 + $0x30] sm:$0xff]
    %v761 = vld [vmem:[#allocation3 + $0x38] sm:$0xff]
    %v762 = vld [vmem:[#allocation3 + $0x40] sm:$0xff]
    %v763 = vld [vmem:[#allocation3 + $0x48] sm:$0xff]
    %v764 = vld [vmem:[#allocation3 + $0x50] sm:$0xff]
    %v765 = vld [vmem:[#allocation3 + $0x58] sm:$0xff]
    %v766 = vld [vmem:[#allocation3 + $0x60] sm:$0xff]
    %v767 = vld [vmem:[#allocation3 + $0x68] sm:$0xff]
    %v768 = vld [vmem:[#allocation3 + $0x70] sm:$0xff]
    %v769 = vld [vmem:[#allocation3 + $0x78] sm:$0xff]
    %v770 = vld [vmem:[#allocation3 + $0x80] sm:$0xff]
    %v771 = vld [vmem:[#allocation3 + $0x88] sm:$0xff]
    %v772 = vld [vmem:[#allocation3 + $0x90] sm:$0xff]
    %v773 = vld [vmem:[#allocation3 + $0x98] sm:$0xff]
    %v774 = vld [vmem:[#allocation3 + $0xa0] sm:$0xff]
    %v775 = vld [vmem:[#allocation3 + $0xa8] sm:$0xff]
    %v776 = vld [vmem:[#allocation3 + $0xb0] sm:$0xff]
    %v777 = vld [vmem:[#allocation3 + $0xb8] sm:$0xff]
    %v778 = vld [vmem:[#allocation3 + $0xc0] sm:$0xff]
    %v779 = vld [vmem:[#allocation3 + $0xc8] sm:$0xff]
    %v780 = vld [vmem:[#allocation3 + $0xd0] sm:$0xff]
    %v781 = vld [vmem:[#allocation3 + $0xd8] sm:$0xff]
    %v782 = vld [vmem:[#allocation3 + $0xe0] sm:$0xff]
    %v783 = vld [vmem:[#allocation3 + $0xe8] sm:$0xff]
    %v784 = vld [vmem:[#allocation3 + $0xf0] sm:$0xff]
    %v785 = vld [vmem:[#allocation3 + $0xf8] sm:$0xff]
    %v786 = vld [vmem:[#allocation3 + $0x100] sm:$0xff]
    %v787 = vld [vmem:[#allocation3 + $0x108] sm:$0xff]
    %v788 = vld [vmem:[#allocation3 + $0x110] sm:$0xff]
    %v789 = vld [vmem:[#allocation3 + $0x118] sm:$0xff]
    %v790 = vld [vmem:[#allocation3 + $0x120] sm:$0xff]
    %v791 = vld [vmem:[#allocation3 + $0x128] sm:$0xff]
    %v792 = vld [vmem:[#allocation3 + $0x130] sm:$0xff]
    %v793 = vld [vmem:[#allocation3 + $0x138] sm:$0xff]
    %v794 = vld [vmem:[#allocation3 + $0x140] sm:$0xff]
    %v795 = vld [vmem:[#allocation3 + $0x148] sm:$0xff]
    %v796 = vld [vmem:[#allocation3 + $0x150] sm:$0xff]
    %v797 = vld [vmem:[#allocation3 + $0x158] sm:$0xff]
    %v798 = vld [vmem:[#allocation3 + $0x160] sm:$0xff]
    %v799 = vld [vmem:[#allocation3 + $0x168] sm:$0xff]
    %v800 = vld [vmem:[#allocation3 + $0x170] sm:$0xff]
    %v801 = vld [vmem:[#allocation3 + $0x178] sm:$0xff]
    %v802 = vld [vmem:[#allocation3 + $0x180] sm:$0xff]
    %v803 = vld [vmem:[#allocation3 + $0x188] sm:$0xff]
    %v804 = vld [vmem:[#allocation3 + $0x190] sm:$0xff]
    %v805 = vld [vmem:[#allocation3 + $0x198] sm:$0xff]
    %v806 = vld [vmem:[#allocation3 + $0x1a0] sm:$0xff]
    %v807 = vld [vmem:[#allocation3 + $0x1a8] sm:$0xff]
    %v808 = vld [vmem:[#allocation3 + $0x1b0] sm:$0xff]
    %v809 = vld [vmem:[#allocation3 + $0x1b8] sm:$0xff]
    %v810 = vld [vmem:[#allocation3 + $0x1c0] sm:$0xff]
    %v811 = vld [vmem:[#allocation3 + $0x1c8] sm:$0xff]
    %v812 = vld [vmem:[#allocation3 + $0x1d0] sm:$0xff]
    %v813 = vld [vmem:[#allocation3 + $0x1d8] sm:$0xff]
    %v814 = vld [vmem:[#allocation3 + $0x1e0] sm:$0xff]
    %v815 = vld [vmem:[#allocation3 + $0x1e8] sm:$0xff]
    %v816 = vld [vmem:[#allocation3 + $0x1f0] sm:$0xff]
    %v817 = vld [vmem:[#allocation3 + $0x1f8] sm:$0xff]
    %v818 = vld [vmem:[%s4] sm:$0x3]
    %v820 = vperm.slane %v818, 0
    %v821 = vperm.slane %v818, 1
    %v888 = vunpack.c.l.b16 %v754
    %v889 = vunpack.c.h.b16 %v754
    %v890 = vunpack.c.l.b16 %v755
    %v891 = vunpack.c.h.b16 %v755
    %v892 = vunpack.c.l.b16 %v756
    %v893 = vunpack.c.h.b16 %v756
    %v894 = vunpack.c.l.b16 %v757
    %v895 = vunpack.c.h.b16 %v757
    %v896 = vunpack.c.l.b16 %v758
    %v897 = vunpack.c.h.b16 %v758
    %v898 = vunpack.c.l.b16 %v759
    %v899 = vunpack.c.h.b16 %v759
    %v900 = vunpack.c.l.b16 %v760
    %v901 = vunpack.c.h.b16 %v760
    %v902 = vunpack.c.l.b16 %v761
    %v903 = vunpack.c.h.b16 %v761
    %v904 = vunpack.c.l.b16 %v762
    %v905 = vunpack.c.h.b16 %v762
    %v906 = vunpack.c.l.b16 %v763
    %v907 = vunpack.c.h.b16 %v763
    %v908 = vunpack.c.l.b16 %v764
    %v909 = vunpack.c.h.b16 %v764
    %v910 = vunpack.c.l.b16 %v765
    %v911 = vunpack.c.h.b16 %v765
    %v912 = vunpack.c.l.b16 %v766
    %v913 = vunpack.c.h.b16 %v766
    %v914 = vunpack.c.l.b16 %v767
    %v915 = vunpack.c.h.b16 %v767
    %v916 = vunpack.c.l.b16 %v768
    %v917 = vunpack.c.h.b16 %v768
    %v918 = vunpack.c.l.b16 %v769
    %v919 = vunpack.c.h.b16 %v769
    %v920 = vunpack.c.l.b16 %v770
    %v921 = vunpack.c.h.b16 %v770
    %v922 = vunpack.c.l.b16 %v771
    %v923 = vunpack.c.h.b16 %v771
    %v924 = vunpack.c.l.b16 %v772
    %v925 = vunpack.c.h.b16 %v772
    %v926 = vunpack.c.l.b16 %v773
    %v927 = vunpack.c.h.b16 %v773
    %v928 = vunpack.c.l.b16 %v774
    %v929 = vunpack.c.h.b16 %v774
    %v930 = vunpack.c.l.b16 %v775
    %v931 = vunpack.c.h.b16 %v775
    %v932 = vunpack.c.l.b16 %v776
    %v933 = vunpack.c.h.b16 %v776
    %v934 = vunpack.c.l.b16 %v777
    %v935 = vunpack.c.h.b16 %v777
    %v936 = vunpack.c.l.b16 %v778
    %v937 = vunpack.c.h.b16 %v778
    %v938 = vunpack.c.l.b16 %v779
    %v939 = vunpack.c.h.b16 %v779
    %v940 = vunpack.c.l.b16 %v780
    %v941 = vunpack.c.h.b16 %v780
    %v942 = vunpack.c.l.b16 %v781
    %v943 = vunpack.c.h.b16 %v781
    %v944 = vunpack.c.l.b16 %v782
    %v945 = vunpack.c.h.b16 %v782
    %v946 = vunpack.c.l.b16 %v783
    %v947 = vunpack.c.h.b16 %v783
    %v948 = vunpack.c.l.b16 %v784
    %v949 = vunpack.c.h.b16 %v784
    %v950 = vunpack.c.l.b16 %v785
    %v951 = vunpack.c.h.b16 %v785
    %v952 = vunpack.c.l.b16 %v786
    %v953 = vunpack.c.h.b16 %v786
    %v954 = vunpack.c.l.b16 %v787
    %v955 = vunpack.c.h.b16 %v787
    %v956 = vunpack.c.l.b16 %v788
    %v957 = vunpack.c.h.b16 %v788
    %v958 = vunpack.c.l.b16 %v789
    %v959 = vunpack.c.h.b16 %v789
    %v960 = vunpack.c.l.b16 %v790
    %v961 = vunpack.c.h.b16 %v790
    %v962 = vunpack.c.l.b16 %v791
    %v963 = vunpack.c.h.b16 %v791
    %v964 = vunpack.c.l.b16 %v792
    %v965 = vunpack.c.h.b16 %v792
    %v966 = vunpack.c.l.b16 %v793
    %v967 = vunpack.c.h.b16 %v793
    %v968 = vunpack.c.l.b16 %v794
    %v969 = vunpack.c.h.b16 %v794
    %v970 = vunpack.c.l.b16 %v795
    %v971 = vunpack.c.h.b16 %v795
    %v972 = vunpack.c.l.b16 %v796
    %v973 = vunpack.c.h.b16 %v796
    %v974 = vunpack.c.l.b16 %v797
    %v975 = vunpack.c.h.b16 %v797
    %v976 = vunpack.c.l.b16 %v798
    %v977 = vunpack.c.h.b16 %v798
    %v978 = vunpack.c.l.b16 %v799
    %v979 = vunpack.c.h.b16 %v799
    %v980 = vunpack.c.l.b16 %v800
    %v981 = vunpack.c.h.b16 %v800
    %v982 = vunpack.c.l.b16 %v801
    %v983 = vunpack.c.h.b16 %v801
    %v984 = vunpack.c.l.b16 %v802
    %v985 = vunpack.c.h.b16 %v802
    %v986 = vunpack.c.l.b16 %v803
    %v987 = vunpack.c.h.b16 %v803
    %v988 = vunpack.c.l.b16 %v804
    %v989 = vunpack.c.h.b16 %v804
    %v990 = vunpack.c.l.b16 %v805
    %v991 = vunpack.c.h.b16 %v805
    %v992 = vunpack.c.l.b16 %v806
    %v993 = vunpack.c.h.b16 %v806
    %v994 = vunpack.c.l.b16 %v807
    %v995 = vunpack.c.h.b16 %v807
    %v996 = vunpack.c.l.b16 %v808
    %v997 = vunpack.c.h.b16 %v808
    %v998 = vunpack.c.l.b16 %v809
    %v999 = vunpack.c.h.b16 %v809
    %v1000 = vunpack.c.l.b16 %v810
    %v1001 = vunpack.c.h.b16 %v810
    %v1002 = vunpack.c.l.b16 %v811
    %v1003 = vunpack.c.h.b16 %v811
    %v1004 = vunpack.c.l.b16 %v812
    %v1005 = vunpack.c.h.b16 %v812
    %v1006 = vunpack.c.l.b16 %v813
    %v1007 = vunpack.c.h.b16 %v813
    %v1008 = vunpack.c.l.b16 %v814
    %v1009 = vunpack.c.h.b16 %v814
    %v1010 = vunpack.c.l.b16 %v815
    %v1011 = vunpack.c.h.b16 %v815
    %v1012 = vunpack.c.l.b16 %v816
    %v1013 = vunpack.c.h.b16 %v816
    %v1014 = vunpack.c.l.b16 %v817
    %v1015 = vunpack.c.h.b16 %v817
    %v1016 = vpack.c.b16 %v890, %v888
    %v1017 = vpack.c.b16 %v891, %v889
    %v1018 = vpack.c.b16 %v894, %v892
    %v1019 = vpack.c.b16 %v895, %v893
    %v1020 = vpack.c.b16 %v898, %v896
    %v1021 = vpack.c.b16 %v899, %v897
    %v1022 = vpack.c.b16 %v902, %v900
    %v1023 = vpack.c.b16 %v903, %v901
    %v1024 = vpack.c.b16 %v906, %v904
    %v1025 = vpack.c.b16 %v907, %v905
    %v1026 = vpack.c.b16 %v910, %v908
    %v1027 = vpack.c.b16 %v911, %v909
    %v1028 = vpack.c.b16 %v914, %v912
    %v1029 = vpack.c.b16 %v915, %v913
    %v1030 = vpack.c.b16 %v918, %v916
    %v1031 = vpack.c.b16 %v919, %v917
    %v1032 = vpack.c.b16 %v922, %v920
    %v1033 = vpack.c.b16 %v923, %v921
    %v1034 = vpack.c.b16 %v926, %v924
    %v1035 = vpack.c.b16 %v927, %v925
    %v1036 = vpack.c.b16 %v930, %v928
    %v1037 = vpack.c.b16 %v931, %v929
    %v1038 = vpack.c.b16 %v934, %v932
    %v1039 = vpack.c.b16 %v935, %v933
    %v1040 = vpack.c.b16 %v938, %v936
    %v1041 = vpack.c.b16 %v939, %v937
    %v1042 = vpack.c.b16 %v942, %v940
    %v1043 = vpack.c.b16 %v943, %v941
    %v1044 = vpack.c.b16 %v946, %v944
    %v1045 = vpack.c.b16 %v947, %v945
    %v1046 = vpack.c.b16 %v950, %v948
    %v1047 = vpack.c.b16 %v951, %v949
    %v1048 = vpack.c.b16 %v954, %v952
    %v1049 = vpack.c.b16 %v955, %v953
    %v1050 = vpack.c.b16 %v958, %v956
    %v1051 = vpack.c.b16 %v959, %v957
    %v1052 = vpack.c.b16 %v962, %v960
    %v1053 = vpack.c.b16 %v963, %v961
    %v1054 = vpack.c.b16 %v966, %v964
    %v1055 = vpack.c.b16 %v967, %v965
    %v1056 = vpack.c.b16 %v970, %v968
    %v1057 = vpack.c.b16 %v971, %v969
    %v1058 = vpack.c.b16 %v974, %v972
    %v1059 = vpack.c.b16 %v975, %v973
    %v1060 = vpack.c.b16 %v978, %v976
    %v1061 = vpack.c.b16 %v979, %v977
    %v1062 = vpack.c.b16 %v982, %v980
    %v1063 = vpack.c.b16 %v983, %v981
    %v1064 = vpack.c.b16 %v986, %v984
    %v1065 = vpack.c.b16 %v987, %v985
    %v1066 = vpack.c.b16 %v990, %v988
    %v1067 = vpack.c.b16 %v991, %v989
    %v1068 = vpack.c.b16 %v994, %v992
    %v1069 = vpack.c.b16 %v995, %v993
    %v1070 = vpack.c.b16 %v998, %v996
    %v1071 = vpack.c.b16 %v999, %v997
    %v1072 = vpack.c.b16 %v1002, %v1000
    %v1073 = vpack.c.b16 %v1003, %v1001
    %v1074 = vpack.c.b16 %v1006, %v1004
    %v1075 = vpack.c.b16 %v1007, %v1005
    %v1076 = vpack.c.b16 %v1010, %v1008
    %v1077 = vpack.c.b16 %v1011, %v1009
    %v1078 = vpack.c.b16 %v1014, %v1012
    %v1079 = vpack.c.b16 %v1015, %v1013
    %1144 = vmatpush.bf16.msra.mxu0 %v1030
    %1145 = vmatpush.bf16.msra.mxu0 %v1028
    %1146 = vmatpush.bf16.msra.mxu0 %v1026
    %1147 = vmatpush.bf16.msra.mxu0 %v1024
    %1148 = vmatpush.bf16.msra.mxu0 %v1022
    %1149 = vmatpush.bf16.msra.mxu0 %v1020
    %1150 = vmatpush.bf16.msra.mxu0 %v1018
    %1151 = vmatpush.bf16.msra.mxu0 %v1016
    %1152 = vmatmul.bf16.gmra.mxu0 %v690
    %v1153 = vpop.f32.mrf.mxu0
    %v1154 = vadd.f32 %v820, %v1153
    %v1155 = vpop.f32.mrf.mxu0
    %v1156 = vadd.f32 %v820, %v1155
    %1157 = vmatmul.bf16.gmra.mxu0 %v694
    %v1158 = vpop.f32.mrf.mxu0
    %v1159 = vadd.f32 %v820, %v1158
    %v1160 = vpop.f32.mrf.mxu0
    %v1161 = vadd.f32 %v820, %v1160
    %1162 = vmatmul.bf16.gmra.mxu0 %v698
    %v1163 = vpop.f32.mrf.mxu0
    %v1164 = vadd.f32 %v820, %v1163
    %v1165 = vpop.f32.mrf.mxu0
    %v1166 = vadd.f32 %v820, %v1165
    %1167 = vmatmul.bf16.gmra.mxu0 %v702
    %v1168 = vpop.f32.mrf.mxu0
    %v1169 = vadd.f32 %v820, %v1168
    %v1170 = vpop.f32.mrf.mxu0
    %v1171 = vadd.f32 %v820, %v1170
    %1172 = vmatmul.bf16.gmra.mxu0 %v706
    %v1173 = vpop.f32.mrf.mxu0
    %v1174 = vadd.f32 %v820, %v1173
    %v1175 = vpop.f32.mrf.mxu0
    %v1176 = vadd.f32 %v820, %v1175
    %1177 = vmatmul.bf16.gmra.mxu0 %v710
    %v1178 = vpop.f32.mrf.mxu0
    %v1179 = vadd.f32 %v820, %v1178
    %v1180 = vpop.f32.mrf.mxu0
    %v1181 = vadd.f32 %v820, %v1180
    %1182 = vmatmul.bf16.gmra.mxu0 %v714
    %v1183 = vpop.f32.mrf.mxu0
    %v1184 = vadd.f32 %v820, %v1183
    %v1185 = vpop.f32.mrf.mxu0
    %v1186 = vadd.f32 %v820, %v1185
    %1187 = vmatmul.bf16.gmra.mxu0 %v718
    %v1188 = vpop.f32.mrf.mxu0
    %v1189 = vadd.f32 %v820, %v1188
    %v1190 = vpop.f32.mrf.mxu0
    %v1191 = vadd.f32 %v820, %v1190
    %1192 = vmatmul.bf16.gmra.mxu0 %v722
    %v1193 = vpop.f32.mrf.mxu0
    %v1194 = vadd.f32 %v820, %v1193
    %v1195 = vpop.f32.mrf.mxu0
    %v1196 = vadd.f32 %v820, %v1195
    %1197 = vmatmul.bf16.gmra.mxu0 %v726
    %v1198 = vpop.f32.mrf.mxu0
    %v1199 = vadd.f32 %v820, %v1198
    %v1200 = vpop.f32.mrf.mxu0
    %v1201 = vadd.f32 %v820, %v1200
    %1202 = vmatmul.bf16.gmra.mxu0 %v730
    %v1203 = vpop.f32.mrf.mxu0
    %v1204 = vadd.f32 %v820, %v1203
    %v1205 = vpop.f32.mrf.mxu0
    %v1206 = vadd.f32 %v820, %v1205
    %1207 = vmatmul.bf16.gmra.mxu0 %v734
    %v1208 = vpop.f32.mrf.mxu0
    %v1209 = vadd.f32 %v820, %v1208
    %v1210 = vpop.f32.mrf.mxu0
    %v1211 = vadd.f32 %v820, %v1210
    %1212 = vmatmul.bf16.gmra.mxu0 %v738
    %v1213 = vpop.f32.mrf.mxu0
    %v1214 = vadd.f32 %v820, %v1213
    %v1215 = vpop.f32.mrf.mxu0
    %v1216 = vadd.f32 %v820, %v1215
    %1217 = vmatmul.bf16.gmra.mxu0 %v742
    %v1218 = vpop.f32.mrf.mxu0
    %v1219 = vadd.f32 %v820, %v1218
    %v1220 = vpop.f32.mrf.mxu0
    %v1221 = vadd.f32 %v820, %v1220
    %1222 = vmatmul.bf16.gmra.mxu0 %v746
    %v1223 = vpop.f32.mrf.mxu0
    %v1224 = vadd.f32 %v820, %v1223
    %v1225 = vpop.f32.mrf.mxu0
    %v1226 = vadd.f32 %v820, %v1225
    %1227 = vmatmul.bf16.gmra.mxu0 %v750
    %v1228 = vpop.f32.mrf.mxu0
    %v1229 = vadd.f32 %v820, %v1228
    %v1230 = vpop.f32.mrf.mxu0
    %v1231 = vadd.f32 %v820, %v1230
    %1232 = vdwg.mxu0
    %1233 = vmatpush.bf16.msra.mxu0 %v1046
    %1234 = vmatpush.bf16.msra.mxu0 %v1044
    %1235 = vmatpush.bf16.msra.mxu0 %v1042
    %1236 = vmatpush.bf16.msra.mxu0 %v1040
    %1237 = vmatpush.bf16.msra.mxu0 %v1038
    %1238 = vmatpush.bf16.msra.mxu0 %v1036
    %1239 = vmatpush.bf16.msra.mxu0 %v1034
    %1240 = vmatpush.bf16.msra.mxu0 %v1032
    %1241 = vmatmul.bf16.gmra.mxu0 %v691
    %v1242 = vpop.f32.mrf.mxu0
    %v1243 = vadd.f32 %v1154, %v1242
    %v1244 = vpop.f32.mrf.mxu0
    %v1245 = vadd.f32 %v1156, %v1244
    %1246 = vmatmul.bf16.gmra.mxu0 %v695
    %v1247 = vpop.f32.mrf.mxu0
    %v1248 = vadd.f32 %v1159, %v1247
    %v1249 = vpop.f32.mrf.mxu0
    %v1250 = vadd.f32 %v1161, %v1249
    %1251 = vmatmul.bf16.gmra.mxu0 %v699
    %v1252 = vpop.f32.mrf.mxu0
    %v1253 = vadd.f32 %v1164, %v1252
    %v1254 = vpop.f32.mrf.mxu0
    %v1255 = vadd.f32 %v1166, %v1254
    %1256 = vmatmul.bf16.gmra.mxu0 %v703
    %v1257 = vpop.f32.mrf.mxu0
    %v1258 = vadd.f32 %v1169, %v1257
    %v1259 = vpop.f32.mrf.mxu0
    %v1260 = vadd.f32 %v1171, %v1259
    %1261 = vmatmul.bf16.gmra.mxu0 %v707
    %v1262 = vpop.f32.mrf.mxu0
    %v1263 = vadd.f32 %v1174, %v1262
    %v1264 = vpop.f32.mrf.mxu0
    %v1265 = vadd.f32 %v1176, %v1264
    %1266 = vmatmul.bf16.gmra.mxu0 %v711
    %v1267 = vpop.f32.mrf.mxu0
    %v1268 = vadd.f32 %v1179, %v1267
    %v1269 = vpop.f32.mrf.mxu0
    %v1270 = vadd.f32 %v1181, %v1269
    %1271 = vmatmul.bf16.gmra.mxu0 %v715
    %v1272 = vpop.f32.mrf.mxu0
    %v1273 = vadd.f32 %v1184, %v1272
    %v1274 = vpop.f32.mrf.mxu0
    %v1275 = vadd.f32 %v1186, %v1274
    %1276 = vmatmul.bf16.gmra.mxu0 %v719
    %v1277 = vpop.f32.mrf.mxu0
    %v1278 = vadd.f32 %v1189, %v1277
    %v1279 = vpop.f32.mrf.mxu0
    %v1280 = vadd.f32 %v1191, %v1279
    %1281 = vmatmul.bf16.gmra.mxu0 %v723
    %v1282 = vpop.f32.mrf.mxu0
    %v1283 = vadd.f32 %v1194, %v1282
    %v1284 = vpop.f32.mrf.mxu0
    %v1285 = vadd.f32 %v1196, %v1284
    %1286 = vmatmul.bf16.gmra.mxu0 %v727
    %v1287 = vpop.f32.mrf.mxu0
    %v1288 = vadd.f32 %v1199, %v1287
    %v1289 = vpop.f32.mrf.mxu0
    %v1290 = vadd.f32 %v1201, %v1289
    %1291 = vmatmul.bf16.gmra.mxu0 %v731
    %v1292 = vpop.f32.mrf.mxu0
    %v1293 = vadd.f32 %v1204, %v1292
    %v1294 = vpop.f32.mrf.mxu0
    %v1295 = vadd.f32 %v1206, %v1294
    %1296 = vmatmul.bf16.gmra.mxu0 %v735
    %v1297 = vpop.f32.mrf.mxu0
    %v1298 = vadd.f32 %v1209, %v1297
    %v1299 = vpop.f32.mrf.mxu0
    %v1300 = vadd.f32 %v1211, %v1299
    %1301 = vmatmul.bf16.gmra.mxu0 %v739
    %v1302 = vpop.f32.mrf.mxu0
    %v1303 = vadd.f32 %v1214, %v1302
    %v1304 = vpop.f32.mrf.mxu0
    %v1305 = vadd.f32 %v1216, %v1304
    %1306 = vmatmul.bf16.gmra.mxu0 %v743
    %v1307 = vpop.f32.mrf.mxu0
    %v1308 = vadd.f32 %v1219, %v1307
    %v1309 = vpop.f32.mrf.mxu0
    %v1310 = vadd.f32 %v1221, %v1309
    %1311 = vmatmul.bf16.gmra.mxu0 %v747
    %v1312 = vpop.f32.mrf.mxu0
    %v1313 = vadd.f32 %v1224, %v1312
    %v1314 = vpop.f32.mrf.mxu0
    %v1315 = vadd.f32 %v1226, %v1314
    %1316 = vmatmul.bf16.gmra.mxu0 %v751
    %v1317 = vpop.f32.mrf.mxu0
    %v1318 = vadd.f32 %v1229, %v1317
    %v1319 = vpop.f32.mrf.mxu0
    %v1320 = vadd.f32 %v1231, %v1319
    %1321 = vdwg.mxu0
    %1322 = vmatpush.bf16.msra.mxu0 %v1062
    %1323 = vmatpush.bf16.msra.mxu0 %v1060
    %1324 = vmatpush.bf16.msra.mxu0 %v1058
    %1325 = vmatpush.bf16.msra.mxu0 %v1056
    %1326 = vmatpush.bf16.msra.mxu0 %v1054
    %1327 = vmatpush.bf16.msra.mxu0 %v1052
    %1328 = vmatpush.bf16.msra.mxu0 %v1050
    %1329 = vmatpush.bf16.msra.mxu0 %v1048
    %1330 = vmatmul.bf16.gmra.mxu0 %v692
    %v1331 = vpop.f32.mrf.mxu0
    %v1332 = vadd.f32 %v1243, %v1331
    %v1333 = vpop.f32.mrf.mxu0
    %v1334 = vadd.f32 %v1245, %v1333
    %1335 = vmatmul.bf16.gmra.mxu0 %v696
    %v1336 = vpop.f32.mrf.mxu0
    %v1337 = vadd.f32 %v1248, %v1336
    %v1338 = vpop.f32.mrf.mxu0
    %v1339 = vadd.f32 %v1250, %v1338
    %1340 = vmatmul.bf16.gmra.mxu0 %v700
    %v1341 = vpop.f32.mrf.mxu0
    %v1342 = vadd.f32 %v1253, %v1341
    %v1343 = vpop.f32.mrf.mxu0
    %v1344 = vadd.f32 %v1255, %v1343
    %1345 = vmatmul.bf16.gmra.mxu0 %v704
    %v1346 = vpop.f32.mrf.mxu0
    %v1347 = vadd.f32 %v1258, %v1346
    %v1348 = vpop.f32.mrf.mxu0
    %v1349 = vadd.f32 %v1260, %v1348
    %1350 = vmatmul.bf16.gmra.mxu0 %v708
    %v1351 = vpop.f32.mrf.mxu0
    %v1352 = vadd.f32 %v1263, %v1351
    %v1353 = vpop.f32.mrf.mxu0
    %v1354 = vadd.f32 %v1265, %v1353
    %1355 = vmatmul.bf16.gmra.mxu0 %v712
    %v1356 = vpop.f32.mrf.mxu0
    %v1357 = vadd.f32 %v1268, %v1356
    %v1358 = vpop.f32.mrf.mxu0
    %v1359 = vadd.f32 %v1270, %v1358
    %1360 = vmatmul.bf16.gmra.mxu0 %v716
    %v1361 = vpop.f32.mrf.mxu0
    %v1362 = vadd.f32 %v1273, %v1361
    %v1363 = vpop.f32.mrf.mxu0
    %v1364 = vadd.f32 %v1275, %v1363
    %1365 = vmatmul.bf16.gmra.mxu0 %v720
    %v1366 = vpop.f32.mrf.mxu0
    %v1367 = vadd.f32 %v1278, %v1366
    %v1368 = vpop.f32.mrf.mxu0
    %v1369 = vadd.f32 %v1280, %v1368
    %1370 = vmatmul.bf16.gmra.mxu0 %v724
    %v1371 = vpop.f32.mrf.mxu0
    %v1372 = vadd.f32 %v1283, %v1371
    %v1373 = vpop.f32.mrf.mxu0
    %v1374 = vadd.f32 %v1285, %v1373
    %1375 = vmatmul.bf16.gmra.mxu0 %v728
    %v1376 = vpop.f32.mrf.mxu0
    %v1377 = vadd.f32 %v1288, %v1376
    %v1378 = vpop.f32.mrf.mxu0
    %v1379 = vadd.f32 %v1290, %v1378
    %1380 = vmatmul.bf16.gmra.mxu0 %v732
    %v1381 = vpop.f32.mrf.mxu0
    %v1382 = vadd.f32 %v1293, %v1381
    %v1383 = vpop.f32.mrf.mxu0
    %v1384 = vadd.f32 %v1295, %v1383
    %1385 = vmatmul.bf16.gmra.mxu0 %v736
    %v1386 = vpop.f32.mrf.mxu0
    %v1387 = vadd.f32 %v1298, %v1386
    %v1388 = vpop.f32.mrf.mxu0
    %v1389 = vadd.f32 %v1300, %v1388
    %1390 = vmatmul.bf16.gmra.mxu0 %v740
    %v1391 = vpop.f32.mrf.mxu0
    %v1392 = vadd.f32 %v1303, %v1391
    %v1393 = vpop.f32.mrf.mxu0
    %v1394 = vadd.f32 %v1305, %v1393
    %1395 = vmatmul.bf16.gmra.mxu0 %v744
    %v1396 = vpop.f32.mrf.mxu0
    %v1397 = vadd.f32 %v1308, %v1396
    %v1398 = vpop.f32.mrf.mxu0
    %v1399 = vadd.f32 %v1310, %v1398
    %1400 = vmatmul.bf16.gmra.mxu0 %v748
    %v1401 = vpop.f32.mrf.mxu0
    %v1402 = vadd.f32 %v1313, %v1401
    %v1403 = vpop.f32.mrf.mxu0
    %v1404 = vadd.f32 %v1315, %v1403
    %1405 = vmatmul.bf16.gmra.mxu0 %v752
    %v1406 = vpop.f32.mrf.mxu0
    %v1407 = vadd.f32 %v1318, %v1406
    %v1408 = vpop.f32.mrf.mxu0
    %v1409 = vadd.f32 %v1320, %v1408
    %1410 = vdwg.mxu0
    %1411 = vmatpush.bf16.msra.mxu0 %v1078
    %1412 = vmatpush.bf16.msra.mxu0 %v1076
    %1413 = vmatpush.bf16.msra.mxu0 %v1074
    %1414 = vmatpush.bf16.msra.mxu0 %v1072
    %1415 = vmatpush.bf16.msra.mxu0 %v1070
    %1416 = vmatpush.bf16.msra.mxu0 %v1068
    %1417 = vmatpush.bf16.msra.mxu0 %v1066
    %1418 = vmatpush.bf16.msra.mxu0 %v1064
    %1419 = vmatmul.bf16.gmra.mxu0 %v693
    %v1420 = vpop.f32.mrf.mxu0
    %v1421 = vadd.f32 %v1332, %v1420
    %v1422 = vpop.f32.mrf.mxu0
    %v1423 = vadd.f32 %v1334, %v1422
    %1424 = vmatmul.bf16.gmra.mxu0 %v697
    %v1425 = vpop.f32.mrf.mxu0
    %v1426 = vadd.f32 %v1337, %v1425
    %v1427 = vpop.f32.mrf.mxu0
    %v1428 = vadd.f32 %v1339, %v1427
    %1429 = vmatmul.bf16.gmra.mxu0 %v701
    %v1430 = vpop.f32.mrf.mxu0
    %v1431 = vadd.f32 %v1342, %v1430
    %v1432 = vpop.f32.mrf.mxu0
    %v1433 = vadd.f32 %v1344, %v1432
    %1434 = vmatmul.bf16.gmra.mxu0 %v705
    %v1435 = vpop.f32.mrf.mxu0
    %v1436 = vadd.f32 %v1347, %v1435
    %v1437 = vpop.f32.mrf.mxu0
    %v1438 = vadd.f32 %v1349, %v1437
    %1439 = vmatmul.bf16.gmra.mxu0 %v709
    %v1440 = vpop.f32.mrf.mxu0
    %v1441 = vadd.f32 %v1352, %v1440
    %v1442 = vpop.f32.mrf.mxu0
    %v1443 = vadd.f32 %v1354, %v1442
    %1444 = vmatmul.bf16.gmra.mxu0 %v713
    %v1445 = vpop.f32.mrf.mxu0
    %v1446 = vadd.f32 %v1357, %v1445
    %v1447 = vpop.f32.mrf.mxu0
    %v1448 = vadd.f32 %v1359, %v1447
    %1449 = vmatmul.bf16.gmra.mxu0 %v717
    %v1450 = vpop.f32.mrf.mxu0
    %v1451 = vadd.f32 %v1362, %v1450
    %v1452 = vpop.f32.mrf.mxu0
    %v1453 = vadd.f32 %v1364, %v1452
    %1454 = vmatmul.bf16.gmra.mxu0 %v721
    %v1455 = vpop.f32.mrf.mxu0
    %v1456 = vadd.f32 %v1367, %v1455
    %v1457 = vpop.f32.mrf.mxu0
    %v1458 = vadd.f32 %v1369, %v1457
    %1459 = vmatmul.bf16.gmra.mxu0 %v725
    %v1460 = vpop.f32.mrf.mxu0
    %v1461 = vadd.f32 %v1372, %v1460
    %v1462 = vpop.f32.mrf.mxu0
    %v1463 = vadd.f32 %v1374, %v1462
    %1464 = vmatmul.bf16.gmra.mxu0 %v729
    %v1465 = vpop.f32.mrf.mxu0
    %v1466 = vadd.f32 %v1377, %v1465
    %v1467 = vpop.f32.mrf.mxu0
    %v1468 = vadd.f32 %v1379, %v1467
    %1469 = vmatmul.bf16.gmra.mxu0 %v733
    %v1470 = vpop.f32.mrf.mxu0
    %v1471 = vadd.f32 %v1382, %v1470
    %v1472 = vpop.f32.mrf.mxu0
    %v1473 = vadd.f32 %v1384, %v1472
    %1474 = vmatmul.bf16.gmra.mxu0 %v737
    %v1475 = vpop.f32.mrf.mxu0
    %v1476 = vadd.f32 %v1387, %v1475
    %v1477 = vpop.f32.mrf.mxu0
    %v1478 = vadd.f32 %v1389, %v1477
    %1479 = vmatmul.bf16.gmra.mxu0 %v741
    %v1480 = vpop.f32.mrf.mxu0
    %v1481 = vadd.f32 %v1392, %v1480
    %v1482 = vpop.f32.mrf.mxu0
    %v1483 = vadd.f32 %v1394, %v1482
    %1484 = vmatmul.bf16.gmra.mxu0 %v745
    %v1485 = vpop.f32.mrf.mxu0
    %v1486 = vadd.f32 %v1397, %v1485
    %v1487 = vpop.f32.mrf.mxu0
    %v1488 = vadd.f32 %v1399, %v1487
    %1489 = vmatmul.bf16.gmra.mxu0 %v749
    %v1490 = vpop.f32.mrf.mxu0
    %v1491 = vadd.f32 %v1402, %v1490
    %v1492 = vpop.f32.mrf.mxu0
    %v1493 = vadd.f32 %v1404, %v1492
    %1494 = vmatmul.bf16.gmra.mxu0 %v753
    %v1495 = vpop.f32.mrf.mxu0
    %v1496 = vadd.f32 %v1407, %v1495
    %v1497 = vpop.f32.mrf.mxu0
    %v1498 = vadd.f32 %v1409, %v1497
    %1499 = vdwg.mxu0
    %1500 = vmatpush.bf16.msra.mxu0 %v1031
    %1501 = vmatpush.bf16.msra.mxu0 %v1029
    %1502 = vmatpush.bf16.msra.mxu0 %v1027
    %1503 = vmatpush.bf16.msra.mxu0 %v1025
    %1504 = vmatpush.bf16.msra.mxu0 %v1023
    %1505 = vmatpush.bf16.msra.mxu0 %v1021
    %1506 = vmatpush.bf16.msra.mxu0 %v1019
    %1507 = vmatpush.bf16.msra.mxu0 %v1017
    %1508 = vmatmul.bf16.gmra.mxu0 %v690
    %v1509 = vpop.f32.mrf.mxu0
    %v1510 = vadd.f32 %v821, %v1509
    %v1511 = vpop.f32.mrf.mxu0
    %v1512 = vadd.f32 %v821, %v1511
    %1513 = vmatmul.bf16.gmra.mxu0 %v694
    %v1514 = vpop.f32.mrf.mxu0
    %v1515 = vadd.f32 %v821, %v1514
    %v1516 = vpop.f32.mrf.mxu0
    %v1517 = vadd.f32 %v821, %v1516
    %1518 = vmatmul.bf16.gmra.mxu0 %v698
    %v1519 = vpop.f32.mrf.mxu0
    %v1520 = vadd.f32 %v821, %v1519
    %v1521 = vpop.f32.mrf.mxu0
    %v1522 = vadd.f32 %v821, %v1521
    %1523 = vmatmul.bf16.gmra.mxu0 %v702
    %v1524 = vpop.f32.mrf.mxu0
    %v1525 = vadd.f32 %v821, %v1524
    %v1526 = vpop.f32.mrf.mxu0
    %v1527 = vadd.f32 %v821, %v1526
    %1528 = vmatmul.bf16.gmra.mxu0 %v706
    %v1529 = vpop.f32.mrf.mxu0
    %v1530 = vadd.f32 %v821, %v1529
    %v1531 = vpop.f32.mrf.mxu0
    %v1532 = vadd.f32 %v821, %v1531
    %1533 = vmatmul.bf16.gmra.mxu0 %v710
    %v1534 = vpop.f32.mrf.mxu0
    %v1535 = vadd.f32 %v821, %v1534
    %v1536 = vpop.f32.mrf.mxu0
    %v1537 = vadd.f32 %v821, %v1536
    %1538 = vmatmul.bf16.gmra.mxu0 %v714
    %v1539 = vpop.f32.mrf.mxu0
    %v1540 = vadd.f32 %v821, %v1539
    %v1541 = vpop.f32.mrf.mxu0
    %v1542 = vadd.f32 %v821, %v1541
    %1543 = vmatmul.bf16.gmra.mxu0 %v718
    %v1544 = vpop.f32.mrf.mxu0
    %v1545 = vadd.f32 %v821, %v1544
    %v1546 = vpop.f32.mrf.mxu0
    %v1547 = vadd.f32 %v821, %v1546
    %1548 = vmatmul.bf16.gmra.mxu0 %v722
    %v1549 = vpop.f32.mrf.mxu0
    %v1550 = vadd.f32 %v821, %v1549
    %v1551 = vpop.f32.mrf.mxu0
    %v1552 = vadd.f32 %v821, %v1551
    %1553 = vmatmul.bf16.gmra.mxu0 %v726
    %v1554 = vpop.f32.mrf.mxu0
    %v1555 = vadd.f32 %v821, %v1554
    %v1556 = vpop.f32.mrf.mxu0
    %v1557 = vadd.f32 %v821, %v1556
    %1558 = vmatmul.bf16.gmra.mxu0 %v730
    %v1559 = vpop.f32.mrf.mxu0
    %v1560 = vadd.f32 %v821, %v1559
    %v1561 = vpop.f32.mrf.mxu0
    %v1562 = vadd.f32 %v821, %v1561
    %1563 = vmatmul.bf16.gmra.mxu0 %v734
    %v1564 = vpop.f32.mrf.mxu0
    %v1565 = vadd.f32 %v821, %v1564
    %v1566 = vpop.f32.mrf.mxu0
    %v1567 = vadd.f32 %v821, %v1566
    %1568 = vmatmul.bf16.gmra.mxu0 %v738
    %v1569 = vpop.f32.mrf.mxu0
    %v1570 = vadd.f32 %v821, %v1569
    %v1571 = vpop.f32.mrf.mxu0
    %v1572 = vadd.f32 %v821, %v1571
    %1573 = vmatmul.bf16.gmra.mxu0 %v742
    %v1574 = vpop.f32.mrf.mxu0
    %v1575 = vadd.f32 %v821, %v1574
    %v1576 = vpop.f32.mrf.mxu0
    %v1577 = vadd.f32 %v821, %v1576
    %1578 = vmatmul.bf16.gmra.mxu0 %v746
    %v1579 = vpop.f32.mrf.mxu0
    %v1580 = vadd.f32 %v821, %v1579
    %v1581 = vpop.f32.mrf.mxu0
    %v1582 = vadd.f32 %v821, %v1581
    %1583 = vmatmul.bf16.gmra.mxu0 %v750
    %v1584 = vpop.f32.mrf.mxu0
    %v1585 = vadd.f32 %v821, %v1584
    %v1586 = vpop.f32.mrf.mxu0
    %v1587 = vadd.f32 %v821, %v1586
    %1588 = vdwg.mxu0
    %1589 = vmatpush.bf16.msra.mxu0 %v1047
    %1590 = vmatpush.bf16.msra.mxu0 %v1045
    %1591 = vmatpush.bf16.msra.mxu0 %v1043
    %1592 = vmatpush.bf16.msra.mxu0 %v1041
    %1593 = vmatpush.bf16.msra.mxu0 %v1039
    %1594 = vmatpush.bf16.msra.mxu0 %v1037
    %1595 = vmatpush.bf16.msra.mxu0 %v1035
    %1596 = vmatpush.bf16.msra.mxu0 %v1033
    %1597 = vmatmul.bf16.gmra.mxu0 %v691
    %v1598 = vpop.f32.mrf.mxu0
    %v1599 = vadd.f32 %v1510, %v1598
    %v1600 = vpop.f32.mrf.mxu0
    %v1601 = vadd.f32 %v1512, %v1600
    %1602 = vmatmul.bf16.gmra.mxu0 %v695
    %v1603 = vpop.f32.mrf.mxu0
    %v1604 = vadd.f32 %v1515, %v1603
    %v1605 = vpop.f32.mrf.mxu0
    %v1606 = vadd.f32 %v1517, %v1605
    %1607 = vmatmul.bf16.gmra.mxu0 %v699
    %v1608 = vpop.f32.mrf.mxu0
    %v1609 = vadd.f32 %v1520, %v1608
    %v1610 = vpop.f32.mrf.mxu0
    %v1611 = vadd.f32 %v1522, %v1610
    %1612 = vmatmul.bf16.gmra.mxu0 %v703
    %v1613 = vpop.f32.mrf.mxu0
    %v1614 = vadd.f32 %v1525, %v1613
    %v1615 = vpop.f32.mrf.mxu0
    %v1616 = vadd.f32 %v1527, %v1615
    %1617 = vmatmul.bf16.gmra.mxu0 %v707
    %v1618 = vpop.f32.mrf.mxu0
    %v1619 = vadd.f32 %v1530, %v1618
    %v1620 = vpop.f32.mrf.mxu0
    %v1621 = vadd.f32 %v1532, %v1620
    %1622 = vmatmul.bf16.gmra.mxu0 %v711
    %v1623 = vpop.f32.mrf.mxu0
    %v1624 = vadd.f32 %v1535, %v1623
    %v1625 = vpop.f32.mrf.mxu0
    %v1626 = vadd.f32 %v1537, %v1625
    %1627 = vmatmul.bf16.gmra.mxu0 %v715
    %v1628 = vpop.f32.mrf.mxu0
    %v1629 = vadd.f32 %v1540, %v1628
    %v1630 = vpop.f32.mrf.mxu0
    %v1631 = vadd.f32 %v1542, %v1630
    %1632 = vmatmul.bf16.gmra.mxu0 %v719
    %v1633 = vpop.f32.mrf.mxu0
    %v1634 = vadd.f32 %v1545, %v1633
    %v1635 = vpop.f32.mrf.mxu0
    %v1636 = vadd.f32 %v1547, %v1635
    %1637 = vmatmul.bf16.gmra.mxu0 %v723
    %v1638 = vpop.f32.mrf.mxu0
    %v1639 = vadd.f32 %v1550, %v1638
    %v1640 = vpop.f32.mrf.mxu0
    %v1641 = vadd.f32 %v1552, %v1640
    %1642 = vmatmul.bf16.gmra.mxu0 %v727
    %v1643 = vpop.f32.mrf.mxu0
    %v1644 = vadd.f32 %v1555, %v1643
    %v1645 = vpop.f32.mrf.mxu0
    %v1646 = vadd.f32 %v1557, %v1645
    %1647 = vmatmul.bf16.gmra.mxu0 %v731
    %v1648 = vpop.f32.mrf.mxu0
    %v1649 = vadd.f32 %v1560, %v1648
    %v1650 = vpop.f32.mrf.mxu0
    %v1651 = vadd.f32 %v1562, %v1650
    %1652 = vmatmul.bf16.gmra.mxu0 %v735
    %v1653 = vpop.f32.mrf.mxu0
    %v1654 = vadd.f32 %v1565, %v1653
    %v1655 = vpop.f32.mrf.mxu0
    %v1656 = vadd.f32 %v1567, %v1655
    %1657 = vmatmul.bf16.gmra.mxu0 %v739
    %v1658 = vpop.f32.mrf.mxu0
    %v1659 = vadd.f32 %v1570, %v1658
    %v1660 = vpop.f32.mrf.mxu0
    %v1661 = vadd.f32 %v1572, %v1660
    %1662 = vmatmul.bf16.gmra.mxu0 %v743
    %v1663 = vpop.f32.mrf.mxu0
    %v1664 = vadd.f32 %v1575, %v1663
    %v1665 = vpop.f32.mrf.mxu0
    %v1666 = vadd.f32 %v1577, %v1665
    %1667 = vmatmul.bf16.gmra.mxu0 %v747
    %v1668 = vpop.f32.mrf.mxu0
    %v1669 = vadd.f32 %v1580, %v1668
    %v1670 = vpop.f32.mrf.mxu0
    %v1671 = vadd.f32 %v1582, %v1670
    %1672 = vmatmul.bf16.gmra.mxu0 %v751
    %v1673 = vpop.f32.mrf.mxu0
    %v1674 = vadd.f32 %v1585, %v1673
    %v1675 = vpop.f32.mrf.mxu0
    %v1676 = vadd.f32 %v1587, %v1675
    %1677 = vdwg.mxu0
    %1678 = vmatpush.bf16.msra.mxu0 %v1063
    %1679 = vmatpush.bf16.msra.mxu0 %v1061
    %1680 = vmatpush.bf16.msra.mxu0 %v1059
    %1681 = vmatpush.bf16.msra.mxu0 %v1057
    %1682 = vmatpush.bf16.msra.mxu0 %v1055
    %1683 = vmatpush.bf16.msra.mxu0 %v1053
    %1684 = vmatpush.bf16.msra.mxu0 %v1051
    %1685 = vmatpush.bf16.msra.mxu0 %v1049
    %1686 = vmatmul.bf16.gmra.mxu0 %v692
    %v1687 = vpop.f32.mrf.mxu0
    %v1688 = vadd.f32 %v1599, %v1687
    %v1689 = vpop.f32.mrf.mxu0
    %v1690 = vadd.f32 %v1601, %v1689
    %1691 = vmatmul.bf16.gmra.mxu0 %v696
    %v1692 = vpop.f32.mrf.mxu0
    %v1693 = vadd.f32 %v1604, %v1692
    %v1694 = vpop.f32.mrf.mxu0
    %v1695 = vadd.f32 %v1606, %v1694
    %1696 = vmatmul.bf16.gmra.mxu0 %v700
    %v1697 = vpop.f32.mrf.mxu0
    %v1698 = vadd.f32 %v1609, %v1697
    %v1699 = vpop.f32.mrf.mxu0
    %v1700 = vadd.f32 %v1611, %v1699
    %1701 = vmatmul.bf16.gmra.mxu0 %v704
    %v1702 = vpop.f32.mrf.mxu0
    %v1703 = vadd.f32 %v1614, %v1702
    %v1704 = vpop.f32.mrf.mxu0
    %v1705 = vadd.f32 %v1616, %v1704
    %1706 = vmatmul.bf16.gmra.mxu0 %v708
    %v1707 = vpop.f32.mrf.mxu0
    %v1708 = vadd.f32 %v1619, %v1707
    %v1709 = vpop.f32.mrf.mxu0
    %v1710 = vadd.f32 %v1621, %v1709
    %1711 = vmatmul.bf16.gmra.mxu0 %v712
    %v1712 = vpop.f32.mrf.mxu0
    %v1713 = vadd.f32 %v1624, %v1712
    %v1714 = vpop.f32.mrf.mxu0
    %v1715 = vadd.f32 %v1626, %v1714
    %1716 = vmatmul.bf16.gmra.mxu0 %v716
    %v1717 = vpop.f32.mrf.mxu0
    %v1718 = vadd.f32 %v1629, %v1717
    %v1719 = vpop.f32.mrf.mxu0
    %v1720 = vadd.f32 %v1631, %v1719
    %1721 = vmatmul.bf16.gmra.mxu0 %v720
    %v1722 = vpop.f32.mrf.mxu0
    %v1723 = vadd.f32 %v1634, %v1722
    %v1724 = vpop.f32.mrf.mxu0
    %v1725 = vadd.f32 %v1636, %v1724
    %1726 = vmatmul.bf16.gmra.mxu0 %v724
    %v1727 = vpop.f32.mrf.mxu0
    %v1728 = vadd.f32 %v1639, %v1727
    %v1729 = vpop.f32.mrf.mxu0
    %v1730 = vadd.f32 %v1641, %v1729
    %1731 = vmatmul.bf16.gmra.mxu0 %v728
    %v1732 = vpop.f32.mrf.mxu0
    %v1733 = vadd.f32 %v1644, %v1732
    %v1734 = vpop.f32.mrf.mxu0
    %v1735 = vadd.f32 %v1646, %v1734
    %1736 = vmatmul.bf16.gmra.mxu0 %v732
    %v1737 = vpop.f32.mrf.mxu0
    %v1738 = vadd.f32 %v1649, %v1737
    %v1739 = vpop.f32.mrf.mxu0
    %v1740 = vadd.f32 %v1651, %v1739
    %1741 = vmatmul.bf16.gmra.mxu0 %v736
    %v1742 = vpop.f32.mrf.mxu0
    %v1743 = vadd.f32 %v1654, %v1742
    %v1744 = vpop.f32.mrf.mxu0
    %v1745 = vadd.f32 %v1656, %v1744
    %1746 = vmatmul.bf16.gmra.mxu0 %v740
    %v1747 = vpop.f32.mrf.mxu0
    %v1748 = vadd.f32 %v1659, %v1747
    %v1749 = vpop.f32.mrf.mxu0
    %v1750 = vadd.f32 %v1661, %v1749
    %1751 = vmatmul.bf16.gmra.mxu0 %v744
    %v1752 = vpop.f32.mrf.mxu0
    %v1753 = vadd.f32 %v1664, %v1752
    %v1754 = vpop.f32.mrf.mxu0
    %v1755 = vadd.f32 %v1666, %v1754
    %1756 = vmatmul.bf16.gmra.mxu0 %v748
    %v1757 = vpop.f32.mrf.mxu0
    %v1758 = vadd.f32 %v1669, %v1757
    %v1759 = vpop.f32.mrf.mxu0
    %v1760 = vadd.f32 %v1671, %v1759
    %1761 = vmatmul.bf16.gmra.mxu0 %v752
    %v1762 = vpop.f32.mrf.mxu0
    %v1763 = vadd.f32 %v1674, %v1762
    %v1764 = vpop.f32.mrf.mxu0
    %v1765 = vadd.f32 %v1676, %v1764
    %1766 = vdwg.mxu0
    %1767 = vmatpush.bf16.msra.mxu0 %v1079
    %1768 = vmatpush.bf16.msra.mxu0 %v1077
    %1769 = vmatpush.bf16.msra.mxu0 %v1075
    %1770 = vmatpush.bf16.msra.mxu0 %v1073
    %1771 = vmatpush.bf16.msra.mxu0 %v1071
    %1772 = vmatpush.bf16.msra.mxu0 %v1069
    %1773 = vmatpush.bf16.msra.mxu0 %v1067
    %1774 = vmatpush.bf16.msra.mxu0 %v1065
    %1775 = vmatmul.bf16.gmra.mxu0 %v693
    %v1776 = vpop.f32.mrf.mxu0
    %v1777 = vadd.f32 %v1688, %v1776
    %v1778 = vpop.f32.mrf.mxu0
    %v1779 = vadd.f32 %v1690, %v1778
    %1780 = vmatmul.bf16.gmra.mxu0 %v697
    %v1781 = vpop.f32.mrf.mxu0
    %v1782 = vadd.f32 %v1693, %v1781
    %v1783 = vpop.f32.mrf.mxu0
    %v1784 = vadd.f32 %v1695, %v1783
    %1785 = vmatmul.bf16.gmra.mxu0 %v701
    %v1786 = vpop.f32.mrf.mxu0
    %v1787 = vadd.f32 %v1698, %v1786
    %v1788 = vpop.f32.mrf.mxu0
    %v1789 = vadd.f32 %v1700, %v1788
    %1790 = vmatmul.bf16.gmra.mxu0 %v705
    %v1791 = vpop.f32.mrf.mxu0
    %v1792 = vadd.f32 %v1703, %v1791
    %v1793 = vpop.f32.mrf.mxu0
    %v1794 = vadd.f32 %v1705, %v1793
    %1795 = vmatmul.bf16.gmra.mxu0 %v709
    %v1796 = vpop.f32.mrf.mxu0
    %v1797 = vadd.f32 %v1708, %v1796
    %v1798 = vpop.f32.mrf.mxu0
    %v1799 = vadd.f32 %v1710, %v1798
    %1800 = vmatmul.bf16.gmra.mxu0 %v713
    %v1801 = vpop.f32.mrf.mxu0
    %v1802 = vadd.f32 %v1713, %v1801
    %v1803 = vpop.f32.mrf.mxu0
    %v1804 = vadd.f32 %v1715, %v1803
    %1805 = vmatmul.bf16.gmra.mxu0 %v717
    %v1806 = vpop.f32.mrf.mxu0
    %v1807 = vadd.f32 %v1718, %v1806
    %v1808 = vpop.f32.mrf.mxu0
    %v1809 = vadd.f32 %v1720, %v1808
    %1810 = vmatmul.bf16.gmra.mxu0 %v721
    %v1811 = vpop.f32.mrf.mxu0
    %v1812 = vadd.f32 %v1723, %v1811
    %v1813 = vpop.f32.mrf.mxu0
    %v1814 = vadd.f32 %v1725, %v1813
    %1815 = vmatmul.bf16.gmra.mxu0 %v725
    %v1816 = vpop.f32.mrf.mxu0
    %v1817 = vadd.f32 %v1728, %v1816
    %v1818 = vpop.f32.mrf.mxu0
    %v1819 = vadd.f32 %v1730, %v1818
    %1820 = vmatmul.bf16.gmra.mxu0 %v729
    %v1821 = vpop.f32.mrf.mxu0
    %v1822 = vadd.f32 %v1733, %v1821
    %v1823 = vpop.f32.mrf.mxu0
    %v1824 = vadd.f32 %v1735, %v1823
    %1825 = vmatmul.bf16.gmra.mxu0 %v733
    %v1826 = vpop.f32.mrf.mxu0
    %v1827 = vadd.f32 %v1738, %v1826
    %v1828 = vpop.f32.mrf.mxu0
    %v1829 = vadd.f32 %v1740, %v1828
    %1830 = vmatmul.bf16.gmra.mxu0 %v737
    %v1831 = vpop.f32.mrf.mxu0
    %v1832 = vadd.f32 %v1743, %v1831
    %v1833 = vpop.f32.mrf.mxu0
    %v1834 = vadd.f32 %v1745, %v1833
    %1835 = vmatmul.bf16.gmra.mxu0 %v741
    %v1836 = vpop.f32.mrf.mxu0
    %v1837 = vadd.f32 %v1748, %v1836
    %v1838 = vpop.f32.mrf.mxu0
    %v1839 = vadd.f32 %v1750, %v1838
    %1840 = vmatmul.bf16.gmra.mxu0 %v745
    %v1841 = vpop.f32.mrf.mxu0
    %v1842 = vadd.f32 %v1753, %v1841
    %v1843 = vpop.f32.mrf.mxu0
    %v1844 = vadd.f32 %v1755, %v1843
    %1845 = vmatmul.bf16.gmra.mxu0 %v749
    %v1846 = vpop.f32.mrf.mxu0
    %v1847 = vadd.f32 %v1758, %v1846
    %v1848 = vpop.f32.mrf.mxu0
    %v1849 = vadd.f32 %v1760, %v1848
    %1850 = vmatmul.bf16.gmra.mxu0 %v753
    %v1851 = vpop.f32.mrf.mxu0
    %v1852 = vadd.f32 %v1763, %v1851
    %v1853 = vpop.f32.mrf.mxu0
    %v1854 = vadd.f32 %v1765, %v1853
    %1855 = vdwg.mxu0
    %v1856 = vmax.f32 %v1421, 0.0
    %v1857 = vmax.f32 %v1777, 0.0
    %v1858 = vmax.f32 %v1423, 0.0
    %v1859 = vmax.f32 %v1779, 0.0
    %v1860 = vmax.f32 %v1426, 0.0
    %v1861 = vmax.f32 %v1782, 0.0
    %v1862 = vmax.f32 %v1428, 0.0
    %v1863 = vmax.f32 %v1784, 0.0
    %v1864 = vmax.f32 %v1431, 0.0
    %v1865 = vmax.f32 %v1787, 0.0
    %v1866 = vmax.f32 %v1433, 0.0
    %v1867 = vmax.f32 %v1789, 0.0
    %v1868 = vmax.f32 %v1436, 0.0
    %v1869 = vmax.f32 %v1792, 0.0
    %v1870 = vmax.f32 %v1438, 0.0
    %v1871 = vmax.f32 %v1794, 0.0
    %v1872 = vmax.f32 %v1441, 0.0
    %v1873 = vmax.f32 %v1797, 0.0
    %v1874 = vmax.f32 %v1443, 0.0
    %v1875 = vmax.f32 %v1799, 0.0
    %v1876 = vmax.f32 %v1446, 0.0
    %v1877 = vmax.f32 %v1802, 0.0
    %v1878 = vmax.f32 %v1448, 0.0
    %v1879 = vmax.f32 %v1804, 0.0
    %v1880 = vmax.f32 %v1451, 0.0
    %v1881 = vmax.f32 %v1807, 0.0
    %v1882 = vmax.f32 %v1453, 0.0
    %v1883 = vmax.f32 %v1809, 0.0
    %v1884 = vmax.f32 %v1456, 0.0
    %v1885 = vmax.f32 %v1812, 0.0
    %v1886 = vmax.f32 %v1458, 0.0
    %v1887 = vmax.f32 %v1814, 0.0
    %v1888 = vmax.f32 %v1461, 0.0
    %v1889 = vmax.f32 %v1817, 0.0
    %v1890 = vmax.f32 %v1463, 0.0
    %v1891 = vmax.f32 %v1819, 0.0
    %v1892 = vmax.f32 %v1466, 0.0
    %v1893 = vmax.f32 %v1822, 0.0
    %v1894 = vmax.f32 %v1468, 0.0
    %v1895 = vmax.f32 %v1824, 0.0
    %v1896 = vmax.f32 %v1471, 0.0
    %v1897 = vmax.f32 %v1827, 0.0
    %v1898 = vmax.f32 %v1473, 0.0
    %v1899 = vmax.f32 %v1829, 0.0
    %v1900 = vmax.f32 %v1476, 0.0
    %v1901 = vmax.f32 %v1832, 0.0
    %v1902 = vmax.f32 %v1478, 0.0
    %v1903 = vmax.f32 %v1834, 0.0
    %v1904 = vmax.f32 %v1481, 0.0
    %v1905 = vmax.f32 %v1837, 0.0
    %v1906 = vmax.f32 %v1483, 0.0
    %v1907 = vmax.f32 %v1839, 0.0
    %v1908 = vmax.f32 %v1486, 0.0
    %v1909 = vmax.f32 %v1842, 0.0
    %v1910 = vmax.f32 %v1488, 0.0
    %v1911 = vmax.f32 %v1844, 0.0
    %v1912 = vmax.f32 %v1491, 0.0
    %v1913 = vmax.f32 %v1847, 0.0
    %v1914 = vmax.f32 %v1493, 0.0
    %v1915 = vmax.f32 %v1849, 0.0
    %v1916 = vmax.f32 %v1496, 0.0
    %v1917 = vmax.f32 %v1852, 0.0
    %v1918 = vmax.f32 %v1498, 0.0
    %v1919 = vmax.f32 %v1854, 0.0
    %v1920 = vpack.c.bf16 %v1858, %v1856
    %v1921 = vpack.c.bf16 %v1859, %v1857
    %v1922 = vpack.c.bf16 %v1862, %v1860
    %v1923 = vpack.c.bf16 %v1863, %v1861
    %v1924 = vpack.c.bf16 %v1866, %v1864
    %v1925 = vpack.c.bf16 %v1867, %v1865
    %v1926 = vpack.c.bf16 %v1870, %v1868
    %v1927 = vpack.c.bf16 %v1871, %v1869
    %v1928 = vpack.c.bf16 %v1874, %v1872
    %v1929 = vpack.c.bf16 %v1875, %v1873
    %v1930 = vpack.c.bf16 %v1878, %v1876
    %v1931 = vpack.c.bf16 %v1879, %v1877
    %v1932 = vpack.c.bf16 %v1882, %v1880
    %v1933 = vpack.c.bf16 %v1883, %v1881
    %v1934 = vpack.c.bf16 %v1886, %v1884
    %v1935 = vpack.c.bf16 %v1887, %v1885
    %v1936 = vpack.c.bf16 %v1890, %v1888
    %v1937 = vpack.c.bf16 %v1891, %v1889
    %v1938 = vpack.c.bf16 %v1894, %v1892
    %v1939 = vpack.c.bf16 %v1895, %v1893
    %v1940 = vpack.c.bf16 %v1898, %v1896
    %v1941 = vpack.c.bf16 %v1899, %v1897
    %v1942 = vpack.c.bf16 %v1902, %v1900
    %v1943 = vpack.c.bf16 %v1903, %v1901
    %v1944 = vpack.c.bf16 %v1906, %v1904
    %v1945 = vpack.c.bf16 %v1907, %v1905
    %v1946 = vpack.c.bf16 %v1910, %v1908
    %v1947 = vpack.c.bf16 %v1911, %v1909
    %v1948 = vpack.c.bf16 %v1914, %v1912
    %v1949 = vpack.c.bf16 %v1915, %v1913
    %v1950 = vpack.c.bf16 %v1918, %v1916
    %v1951 = vpack.c.bf16 %v1919, %v1917
    %v1952 = vld [vmem:[%s5] sm:$0xf]
    %v1953 = vld [vmem:[%s5 + $0x4] sm:$0xf]
    %v1954 = vld [vmem:[%s5 + $0x8] sm:$0xf]
    %v1955 = vld [vmem:[%s5 + $0xc] sm:$0xf]
    %v1956 = vld [vmem:[%s5 + $0x10] sm:$0xf]
    %v1957 = vld [vmem:[%s5 + $0x14] sm:$0xf]
    %v1958 = vld [vmem:[%s5 + $0x18] sm:$0xf]
    %v1959 = vld [vmem:[%s5 + $0x1c] sm:$0xf]
    %v1960 = vld [vmem:[%s5 + $0x20] sm:$0xf]
    %v1961 = vld [vmem:[%s5 + $0x24] sm:$0xf]
    %v1962 = vld [vmem:[%s5 + $0x28] sm:$0xf]
    %v1963 = vld [vmem:[%s5 + $0x2c] sm:$0xf]
    %v1964 = vld [vmem:[%s5 + $0x30] sm:$0xf]
    %v1965 = vld [vmem:[%s5 + $0x34] sm:$0xf]
    %v1966 = vld [vmem:[%s5 + $0x38] sm:$0xf]
    %v1967 = vld [vmem:[%s5 + $0x3c] sm:$0xf]
    %v1968 = vld [vmem:[%s5 + $0x40] sm:$0xf]
    %v1969 = vld [vmem:[%s5 + $0x44] sm:$0xf]
    %v1970 = vld [vmem:[%s5 + $0x48] sm:$0xf]
    %v1971 = vld [vmem:[%s5 + $0x4c] sm:$0xf]
    %v1972 = vld [vmem:[%s5 + $0x50] sm:$0xf]
    %v1973 = vld [vmem:[%s5 + $0x54] sm:$0xf]
    %v1974 = vld [vmem:[%s5 + $0x58] sm:$0xf]
    %v1975 = vld [vmem:[%s5 + $0x5c] sm:$0xf]
    %v1976 = vld [vmem:[%s5 + $0x60] sm:$0xf]
    %v1977 = vld [vmem:[%s5 + $0x64] sm:$0xf]
    %v1978 = vld [vmem:[%s5 + $0x68] sm:$0xf]
    %v1979 = vld [vmem:[%s5 + $0x6c] sm:$0xf]
    %v1980 = vld [vmem:[%s5 + $0x70] sm:$0xf]
    %v1981 = vld [vmem:[%s5 + $0x74] sm:$0xf]
    %v1982 = vld [vmem:[%s5 + $0x78] sm:$0xf]
    %v1983 = vld [vmem:[%s5 + $0x7c] sm:$0xf]
    %v1984 = vld [vmem:[%s6] sm:$0x1]
    %v1986 = vperm.slane %v1984, 0
    %v2020 = vunpack.c.l.b16 %v1952
    %v2021 = vunpack.c.l.b16 %v1953
    %v2022 = vunpack.c.l.b16 %v1954
    %v2023 = vunpack.c.l.b16 %v1955
    %v2024 = vunpack.c.l.b16 %v1956
    %v2025 = vunpack.c.l.b16 %v1957
    %v2026 = vunpack.c.l.b16 %v1958
    %v2027 = vunpack.c.l.b16 %v1959
    %v2028 = vunpack.c.l.b16 %v1960
    %v2029 = vunpack.c.l.b16 %v1961
    %v2030 = vunpack.c.l.b16 %v1962
    %v2031 = vunpack.c.l.b16 %v1963
    %v2032 = vunpack.c.l.b16 %v1964
    %v2033 = vunpack.c.l.b16 %v1965
    %v2034 = vunpack.c.l.b16 %v1966
    %v2035 = vunpack.c.l.b16 %v1967
    %v2036 = vunpack.c.l.b16 %v1968
    %v2037 = vunpack.c.l.b16 %v1969
    %v2038 = vunpack.c.l.b16 %v1970
    %v2039 = vunpack.c.l.b16 %v1971
    %v2040 = vunpack.c.l.b16 %v1972
    %v2041 = vunpack.c.l.b16 %v1973
    %v2042 = vunpack.c.l.b16 %v1974
    %v2043 = vunpack.c.l.b16 %v1975
    %v2044 = vunpack.c.l.b16 %v1976
    %v2045 = vunpack.c.l.b16 %v1977
    %v2046 = vunpack.c.l.b16 %v1978
    %v2047 = vunpack.c.l.b16 %v1979
    %v2048 = vunpack.c.l.b16 %v1980
    %v2049 = vunpack.c.l.b16 %v1981
    %v2050 = vunpack.c.l.b16 %v1982
    %v2051 = vunpack.c.l.b16 %v1983
    %v2052 = vpack.c.b16 %v2021, %v2020
    %v2053 = vpack.c.b16 %v2023, %v2022
    %v2054 = vpack.c.b16 %v2025, %v2024
    %v2055 = vpack.c.b16 %v2027, %v2026
    %v2056 = vpack.c.b16 %v2029, %v2028
    %v2057 = vpack.c.b16 %v2031, %v2030
    %v2058 = vpack.c.b16 %v2033, %v2032
    %v2059 = vpack.c.b16 %v2035, %v2034
    %v2060 = vpack.c.b16 %v2037, %v2036
    %v2061 = vpack.c.b16 %v2039, %v2038
    %v2062 = vpack.c.b16 %v2041, %v2040
    %v2063 = vpack.c.b16 %v2043, %v2042
    %v2064 = vpack.c.b16 %v2045, %v2044
    %v2065 = vpack.c.b16 %v2047, %v2046
    %v2066 = vpack.c.b16 %v2049, %v2048
    %v2067 = vpack.c.b16 %v2051, %v2050
    %2084 = vmatpush.bf16.msra.mxu0 %v2059
    %2085 = vmatpush.bf16.msra.mxu0 %v2058
    %2086 = vmatpush.bf16.msra.mxu0 %v2057
    %2087 = vmatpush.bf16.msra.mxu0 %v2056
    %2088 = vmatpush.bf16.msra.mxu0 %v2055
    %2089 = vmatpush.bf16.msra.mxu0 %v2054
    %2090 = vmatpush.bf16.msra.mxu0 %v2053
    %2091 = vmatpush.bf16.msra.mxu0 %v2052
    %2092 = vmatmul.bf16.gmra.mxu0 %v1920
    %v2093 = vpop.f32.mrf.mxu0
    %v2094 = vadd.f32 %v1986, %v2093
    %v2095 = vpop.f32.mrf.mxu0
    %v2096 = vadd.f32 %v1986, %v2095
    %2097 = vmatmul.bf16.gmra.mxu0 %v1922
    %v2098 = vpop.f32.mrf.mxu0
    %v2099 = vadd.f32 %v1986, %v2098
    %v2100 = vpop.f32.mrf.mxu0
    %v2101 = vadd.f32 %v1986, %v2100
    %2102 = vmatmul.bf16.gmra.mxu0 %v1924
    %v2103 = vpop.f32.mrf.mxu0
    %v2104 = vadd.f32 %v1986, %v2103
    %v2105 = vpop.f32.mrf.mxu0
    %v2106 = vadd.f32 %v1986, %v2105
    %2107 = vmatmul.bf16.gmra.mxu0 %v1926
    %v2108 = vpop.f32.mrf.mxu0
    %v2109 = vadd.f32 %v1986, %v2108
    %v2110 = vpop.f32.mrf.mxu0
    %v2111 = vadd.f32 %v1986, %v2110
    %2112 = vmatmul.bf16.gmra.mxu0 %v1928
    %v2113 = vpop.f32.mrf.mxu0
    %v2114 = vadd.f32 %v1986, %v2113
    %v2115 = vpop.f32.mrf.mxu0
    %v2116 = vadd.f32 %v1986, %v2115
    %2117 = vmatmul.bf16.gmra.mxu0 %v1930
    %v2118 = vpop.f32.mrf.mxu0
    %v2119 = vadd.f32 %v1986, %v2118
    %v2120 = vpop.f32.mrf.mxu0
    %v2121 = vadd.f32 %v1986, %v2120
    %2122 = vmatmul.bf16.gmra.mxu0 %v1932
    %v2123 = vpop.f32.mrf.mxu0
    %v2124 = vadd.f32 %v1986, %v2123
    %v2125 = vpop.f32.mrf.mxu0
    %v2126 = vadd.f32 %v1986, %v2125
    %2127 = vmatmul.bf16.gmra.mxu0 %v1934
    %v2128 = vpop.f32.mrf.mxu0
    %v2129 = vadd.f32 %v1986, %v2128
    %v2130 = vpop.f32.mrf.mxu0
    %v2131 = vadd.f32 %v1986, %v2130
    %2132 = vmatmul.bf16.gmra.mxu0 %v1936
    %v2133 = vpop.f32.mrf.mxu0
    %v2134 = vadd.f32 %v1986, %v2133
    %v2135 = vpop.f32.mrf.mxu0
    %v2136 = vadd.f32 %v1986, %v2135
    %2137 = vmatmul.bf16.gmra.mxu0 %v1938
    %v2138 = vpop.f32.mrf.mxu0
    %v2139 = vadd.f32 %v1986, %v2138
    %v2140 = vpop.f32.mrf.mxu0
    %v2141 = vadd.f32 %v1986, %v2140
    %2142 = vmatmul.bf16.gmra.mxu0 %v1940
    %v2143 = vpop.f32.mrf.mxu0
    %v2144 = vadd.f32 %v1986, %v2143
    %v2145 = vpop.f32.mrf.mxu0
    %v2146 = vadd.f32 %v1986, %v2145
    %2147 = vmatmul.bf16.gmra.mxu0 %v1942
    %v2148 = vpop.f32.mrf.mxu0
    %v2149 = vadd.f32 %v1986, %v2148
    %v2150 = vpop.f32.mrf.mxu0
    %v2151 = vadd.f32 %v1986, %v2150
    %2152 = vmatmul.bf16.gmra.mxu0 %v1944
    %v2153 = vpop.f32.mrf.mxu0
    %v2154 = vadd.f32 %v1986, %v2153
    %v2155 = vpop.f32.mrf.mxu0
    %v2156 = vadd.f32 %v1986, %v2155
    %2157 = vmatmul.bf16.gmra.mxu0 %v1946
    %v2158 = vpop.f32.mrf.mxu0
    %v2159 = vadd.f32 %v1986, %v2158
    %v2160 = vpop.f32.mrf.mxu0
    %v2161 = vadd.f32 %v1986, %v2160
    %2162 = vmatmul.bf16.gmra.mxu0 %v1948
    %v2163 = vpop.f32.mrf.mxu0
    %v2164 = vadd.f32 %v1986, %v2163
    %v2165 = vpop.f32.mrf.mxu0
    %v2166 = vadd.f32 %v1986, %v2165
    %2167 = vmatmul.bf16.gmra.mxu0 %v1950
    %v2168 = vpop.f32.mrf.mxu0
    %v2169 = vadd.f32 %v1986, %v2168
    %v2170 = vpop.f32.mrf.mxu0
    %v2171 = vadd.f32 %v1986, %v2170
    %2172 = vdwg.mxu0
    %2173 = vmatpush.bf16.msra.mxu0 %v2067
    %2174 = vmatpush.bf16.msra.mxu0 %v2066
    %2175 = vmatpush.bf16.msra.mxu0 %v2065
    %2176 = vmatpush.bf16.msra.mxu0 %v2064
    %2177 = vmatpush.bf16.msra.mxu0 %v2063
    %2178 = vmatpush.bf16.msra.mxu0 %v2062
    %2179 = vmatpush.bf16.msra.mxu0 %v2061
    %2180 = vmatpush.bf16.msra.mxu0 %v2060
    %2181 = vmatmul.bf16.gmra.mxu0 %v1921
    %v2182 = vpop.f32.mrf.mxu0
    %v2183 = vadd.f32 %v2094, %v2182
    %v2184 = vpop.f32.mrf.mxu0
    %v2185 = vadd.f32 %v2096, %v2184
    %2186 = vmatmul.bf16.gmra.mxu0 %v1923
    %v2187 = vpop.f32.mrf.mxu0
    %v2188 = vadd.f32 %v2099, %v2187
    %v2189 = vpop.f32.mrf.mxu0
    %v2190 = vadd.f32 %v2101, %v2189
    %2191 = vmatmul.bf16.gmra.mxu0 %v1925
    %v2192 = vpop.f32.mrf.mxu0
    %v2193 = vadd.f32 %v2104, %v2192
    %v2194 = vpop.f32.mrf.mxu0
    %v2195 = vadd.f32 %v2106, %v2194
    %2196 = vmatmul.bf16.gmra.mxu0 %v1927
    %v2197 = vpop.f32.mrf.mxu0
    %v2198 = vadd.f32 %v2109, %v2197
    %v2199 = vpop.f32.mrf.mxu0
    %v2200 = vadd.f32 %v2111, %v2199
    %2201 = vmatmul.bf16.gmra.mxu0 %v1929
    %v2202 = vpop.f32.mrf.mxu0
    %v2203 = vadd.f32 %v2114, %v2202
    %v2204 = vpop.f32.mrf.mxu0
    %v2205 = vadd.f32 %v2116, %v2204
    %2206 = vmatmul.bf16.gmra.mxu0 %v1931
    %v2207 = vpop.f32.mrf.mxu0
    %v2208 = vadd.f32 %v2119, %v2207
    %v2209 = vpop.f32.mrf.mxu0
    %v2210 = vadd.f32 %v2121, %v2209
    %2211 = vmatmul.bf16.gmra.mxu0 %v1933
    %v2212 = vpop.f32.mrf.mxu0
    %v2213 = vadd.f32 %v2124, %v2212
    %v2214 = vpop.f32.mrf.mxu0
    %v2215 = vadd.f32 %v2126, %v2214
    %2216 = vmatmul.bf16.gmra.mxu0 %v1935
    %v2217 = vpop.f32.mrf.mxu0
    %v2218 = vadd.f32 %v2129, %v2217
    %v2219 = vpop.f32.mrf.mxu0
    %v2220 = vadd.f32 %v2131, %v2219
    %2221 = vmatmul.bf16.gmra.mxu0 %v1937
    %v2222 = vpop.f32.mrf.mxu0
    %v2223 = vadd.f32 %v2134, %v2222
    %v2224 = vpop.f32.mrf.mxu0
    %v2225 = vadd.f32 %v2136, %v2224
    %2226 = vmatmul.bf16.gmra.mxu0 %v1939
    %v2227 = vpop.f32.mrf.mxu0
    %v2228 = vadd.f32 %v2139, %v2227
    %v2229 = vpop.f32.mrf.mxu0
    %v2230 = vadd.f32 %v2141, %v2229
    %2231 = vmatmul.bf16.gmra.mxu0 %v1941
    %v2232 = vpop.f32.mrf.mxu0
    %v2233 = vadd.f32 %v2144, %v2232
    %v2234 = vpop.f32.mrf.mxu0
    %v2235 = vadd.f32 %v2146, %v2234
    %2236 = vmatmul.bf16.gmra.mxu0 %v1943
    %v2237 = vpop.f32.mrf.mxu0
    %v2238 = vadd.f32 %v2149, %v2237
    %v2239 = vpop.f32.mrf.mxu0
    %v2240 = vadd.f32 %v2151, %v2239
    %2241 = vmatmul.bf16.gmra.mxu0 %v1945
    %v2242 = vpop.f32.mrf.mxu0
    %v2243 = vadd.f32 %v2154, %v2242
    %v2244 = vpop.f32.mrf.mxu0
    %v2245 = vadd.f32 %v2156, %v2244
    %2246 = vmatmul.bf16.gmra.mxu0 %v1947
    %v2247 = vpop.f32.mrf.mxu0
    %v2248 = vadd.f32 %v2159, %v2247
    %v2249 = vpop.f32.mrf.mxu0
    %v2250 = vadd.f32 %v2161, %v2249
    %2251 = vmatmul.bf16.gmra.mxu0 %v1949
    %v2252 = vpop.f32.mrf.mxu0
    %v2253 = vadd.f32 %v2164, %v2252
    %v2254 = vpop.f32.mrf.mxu0
    %v2255 = vadd.f32 %v2166, %v2254
    %2256 = vmatmul.bf16.gmra.mxu0 %v1951
    %v2257 = vpop.f32.mrf.mxu0
    %v2258 = vadd.f32 %v2169, %v2257
    %v2259 = vpop.f32.mrf.mxu0
    %v2260 = vadd.f32 %v2171, %v2259
    %2261 = vdwg.mxu0
    %v2262 = vmax.f32 %v2183, 0.0
    %v2263 = vmax.f32 %v2185, 0.0
    %v2264 = vmax.f32 %v2188, 0.0
    %v2265 = vmax.f32 %v2190, 0.0
    %v2266 = vmax.f32 %v2193, 0.0
    %v2267 = vmax.f32 %v2195, 0.0
    %v2268 = vmax.f32 %v2198, 0.0
    %v2269 = vmax.f32 %v2200, 0.0
    %v2270 = vmax.f32 %v2203, 0.0
    %v2271 = vmax.f32 %v2205, 0.0
    %v2272 = vmax.f32 %v2208, 0.0
    %v2273 = vmax.f32 %v2210, 0.0
    %v2274 = vmax.f32 %v2213, 0.0
    %v2275 = vmax.f32 %v2215, 0.0
    %v2276 = vmax.f32 %v2218, 0.0
    %v2277 = vmax.f32 %v2220, 0.0
    %v2278 = vmax.f32 %v2223, 0.0
    %v2279 = vmax.f32 %v2225, 0.0
    %v2280 = vmax.f32 %v2228, 0.0
    %v2281 = vmax.f32 %v2230, 0.0
    %v2282 = vmax.f32 %v2233, 0.0
    %v2283 = vmax.f32 %v2235, 0.0
    %v2284 = vmax.f32 %v2238, 0.0
    %v2285 = vmax.f32 %v2240, 0.0
    %v2286 = vmax.f32 %v2243, 0.0
    %v2287 = vmax.f32 %v2245, 0.0
    %v2288 = vmax.f32 %v2248, 0.0
    %v2289 = vmax.f32 %v2250, 0.0
    %v2290 = vmax.f32 %v2253, 0.0
    %v2291 = vmax.f32 %v2255, 0.0
    %v2292 = vmax.f32 %v2258, 0.0
    %v2293 = vmax.f32 %v2260, 0.0
    %v2294 = vld [vmem:[%s7] sm:$0x1]
    %v2295 = vpack.c.bf16 %v2263, %v2262
    %v2296 = vpack.c.bf16 %v2265, %v2264
    %v2297 = vpack.c.bf16 %v2267, %v2266
    %v2298 = vpack.c.bf16 %v2269, %v2268
    %v2299 = vpack.c.bf16 %v2271, %v2270
    %v2300 = vpack.c.bf16 %v2273, %v2272
    %v2301 = vpack.c.bf16 %v2275, %v2274
    %v2302 = vpack.c.bf16 %v2277, %v2276
    %v2303 = vpack.c.bf16 %v2279, %v2278
    %v2304 = vpack.c.bf16 %v2281, %v2280
    %v2305 = vpack.c.bf16 %v2283, %v2282
    %v2306 = vpack.c.bf16 %v2285, %v2284
    %v2307 = vpack.c.bf16 %v2287, %v2286
    %v2308 = vpack.c.bf16 %v2289, %v2288
    %v2309 = vpack.c.bf16 %v2291, %v2290
    %v2310 = vpack.c.bf16 %v2293, %v2292
    %s2311 = sld [smem:[#allocation2]]
    %v2312 = vstv %s2311
    %2313 = vmatpush.bf16.xpose.msra.mxu0 %v2302
    %2314 = vmatpush.bf16.xpose.msra.mxu0 %v2301
    %2315 = vmatpush.bf16.xpose.msra.mxu0 %v2300
    %2316 = vmatpush.bf16.xpose.msra.mxu0 %v2299
    %2317 = vmatpush.bf16.xpose.msra.mxu0 %v2298
    %2318 = vmatpush.bf16.xpose.msra.mxu0 %v2297
    %2319 = vmatpush.bf16.xpose.msra.mxu0 %v2296
    %2320 = vmatpush.bf16.xpose.msra.mxu0 %v2295
    %2321 = vmatmul.bf16.gmra.mxu0 %v2294
    %v2322 = vpop.f32.mrf.mxu0
    %v2323 = vadd.f32 %v2312, %v2322
    %v2324 = vpop.f32.mrf.mxu0
    %2325 = vdwg.mxu0
    %2326 = vmatpush.bf16.xpose.msra.mxu0 %v2310
    %2327 = vmatpush.bf16.xpose.msra.mxu0 %v2309
    %2328 = vmatpush.bf16.xpose.msra.mxu0 %v2308
    %2329 = vmatpush.bf16.xpose.msra.mxu0 %v2307
    %2330 = vmatpush.bf16.xpose.msra.mxu0 %v2306
    %2331 = vmatpush.bf16.xpose.msra.mxu0 %v2305
    %2332 = vmatpush.bf16.xpose.msra.mxu0 %v2304
    %2333 = vmatpush.bf16.xpose.msra.mxu0 %v2303
    %2334 = vmatmul.bf16.gmra.mxu0 %v2294
    %v2335 = vpop.f32.mrf.mxu0
    %v2336 = vadd.f32 %v2312, %v2335
    %v2337 = vpop.f32.mrf.mxu0
    %2338 = vdwg.mxu0
    %v2341 = vrot.slane %v2336, 7
    %vm2342 = vcmask 1040384
    %v2343 = vsel %vm2342, %v2323, %v2341
    %v2345 = vlaneseq
    %vm2346 = vcmp.ge.s32.totalorder %v2345, 0
    %vm2347 = vcmp.lt.s32.totalorder %v2345, 256
    %vm2348 = vmand %vm2346, %vm2347
    %2349 = vst.msk [vmem:[#allocation6] sm:$0x3] %vm2348, %v2343
    // Predicated region
    $region42: #{tpu_custom_call.1} parent=1 // pred_check
      _
    $region43: #{tpu_custom_call.1} parent=1 // pred_check_branch
      %2351 = sbr.rel (0) target = $region45
    $region44: #{tpu_custom_call.1} parent=1 // pred_region
      %2353 = vsyncadd [#allocation5], 0
      %s2355 = sshll.u32 [#allocation6], 4
      %s2356 = int_to_ptr.vmem [resolvable:$true] %s2355
      %s2357 = sshll.u32 %s9, 4
      %s2358 = int_to_ptr.hbm [resolvable:$true] %s2357
      %2360 = dma.vmem_to_hbm [thread:$0]  %s2356, 32, %s2358, [#allocation5]
    $region45: #{tpu_custom_call.1} parent=1 // pred_fallthru
      _
    // Predicated region
    $region46: #{tpu_custom_call.1} parent=1 // pred_check
      _
    $region47: #{tpu_custom_call.1} parent=1 // pred_check_branch
      %2362 = sbr.rel (0) target = $region49
    $region48: #{tpu_custom_call.1} parent=1 // pred_region
      %2364 = dma.done [#allocation5], 32
    $region49: #{tpu_custom_call.1} parent=1 // pred_fallthru
      _
    %2365 = vsyncpa [#allocation4], 1
    %2366 = vsyncpa [#allocation5], 1

</llo_original>
